<compile_context>
chip_gen: v6e
topology: v6e:2x2x1
jax: 0.10.0
libtpu: 0.0.40
codegen_flags: <defaults>
</compile_context>

<pallas_src>
import jax
import jax.numpy as jnp
import numpy as np
from jax import lax
from jax.experimental import pallas as pl
from jax.experimental.pallas import tpu as pltpu

_LANES = 128


def _corr_loss_kernel(src_ref, tgt_ref, m_ref, out_ref):
    src = src_ref[...].astype(jnp.float32)          # (Bt, N, D)
    tgt = tgt_ref[...].astype(jnp.float32)          # (Bt, N, D)
    m = m_ref[...].astype(jnp.float32)[:, 0, :]     # (Bt, N), keypoint idx on lanes

    # L2-normalize along the descriptor dimension D.
    src = src * lax.rsqrt(jnp.sum(src * src, axis=2, keepdims=True) + 1e-12)
    tgt = tgt * lax.rsqrt(jnp.sum(tgt * tgt, axis=2, keepdims=True) + 1e-12)

    # Diagonal S_ii = <src_i, tgt_i> computed directly (O(N*D), no NxN eye mask).
    diag = jnp.sum(src * tgt, axis=2)               # (Bt, N)

    # Full similarity matrix on the MXU (flash-attention-style contraction).
    S = jnp.einsum("bid,bjd->bij", src, tgt,
                   preferred_element_type=jnp.float32)   # (Bt, N, N)

    # |S| <= 1 (cosine similarities) -> single un-stabilized exp pass is safe.
    E = jnp.exp(S)
    lse_row = jnp.log(jnp.sum(E, axis=2))           # (Bt, N)  logsumexp over j
    lse_col = jnp.log(jnp.sum(E, axis=1))           # (Bt, N)  logsumexp over i

    # 0.5 * sum_i m_i [ (lse_row_i - S_ii) + (lse_col_i - S_ii) ]
    loss_sum = 0.5 * jnp.sum(m * (lse_row + lse_col - 2.0 * diag))
    cnt_sum = jnp.sum(m)

    # One unmasked, lane-dense full-block store of the partial results.
    lanes = out_ref.shape[2]
    sub = lax.broadcasted_iota(jnp.int32, (1, 2, lanes), 1)
    out_ref[...] = jnp.where(sub == 0,
                             jnp.broadcast_to(loss_sum, (1, 2, lanes)),
                             jnp.broadcast_to(cnt_sum, (1, 2, lanes)))


def _pick_block_b(B):
    """Batches per grid step: big enough to amortize per-step overhead, but
    always leaving G = B // bt >= 2 when B > 1 so both v7x TensorCores work."""
    if B <= 1:
        return 1
    max_bt = B // 2
    for cand in (32, 16, 8, 4, 2):
        if cand <= max_bt and B % cand == 0:
            return cand
    return 1


def corr_loss(src_desc, tgt_desc, kpt_mask):
    """src_desc, tgt_desc: (B, N, D); kpt_mask: (B, N). Returns scalar f32."""
    B, N, D = src_desc.shape
    # Contiguous reshape only (no HBM transpose, no dtype change of descriptors).
    mask_row = kpt_mask.reshape(B, 1, N).astype(jnp.float32)     # (B, 1, N)

    bt = _pick_block_b(B)
    G = B // bt

    # Conservative per-step VMEM estimate (inputs double-buffered, lane padding
    # of the (N, D) tiles, plus S / E / normalized f32 copies).
    lane_pad = max(D, _LANES)
    est_vmem = (2 * 2 * bt * N * lane_pad * 4          # src/tgt input buffers
                + 2 * bt * _LANES * 4                  # mask buffers
                + bt * (2 * N * N + 4 * N * lane_pad) * 4  # S, E, normalized copies
                + (2 << 20))                           # headroom
    vmem_limit = int(min(max(est_vmem, 32 << 20), 64 << 20))

    out = pl.pallas_call(
        _corr_loss_kernel,
        out_shape=jax.ShapeDtypeStruct((G, 2, _LANES), jnp.float32),
        grid_spec=pltpu.PrefetchScalarGridSpec(
            num_scalar_prefetch=0,
            grid=(G,),
            in_specs=[
                pl.BlockSpec((bt, N, D), lambda g: (g, 0, 0)),
                pl.BlockSpec((bt, N, D), lambda g: (g, 0, 0)),
                pl.BlockSpec((bt, 1, N), lambda g: (g, 0, 0)),
            ],
            out_specs=pl.BlockSpec((1, 2, _LANES), lambda g: (g, 0, 0)),
        ),
        compiler_params=pltpu.CompilerParams(
            # Each grid step writes a disjoint partial-output block, so the
            # batch axis is truly parallel (shards across 2 TCs on v7x).
            dimension_semantics=("parallel",),
            vmem_limit_bytes=vmem_limit,
        ),
    )(src_desc, tgt_desc, mask_row)

    loss_total = jnp.sum(out[:, 0, 0])
    cnt_total = jnp.sum(out[:, 1, 0])
    return loss_total / jnp.maximum(cnt_total, 1.0)


def corr_loss_ref(src_desc, tgt_desc, kpt_mask):
    """Pure-JAX reference with identical semantics."""
    src = src_desc.astype(jnp.float32)
    tgt = tgt_desc.astype(jnp.float32)
    src = src / jnp.sqrt(jnp.sum(src * src, axis=-1, keepdims=True) + 1e-12)
    tgt = tgt / jnp.sqrt(jnp.sum(tgt * tgt, axis=-1, keepdims=True) + 1e-12)
    S = jnp.einsum("bid,bjd->bij", src, tgt)
    diag = jnp.einsum("bii->bi", S)
    lse_row = jax.scipy.special.logsumexp(S, axis=2)
    lse_col = jax.scipy.special.logsumexp(S, axis=1)
    per_kpt = 0.5 * ((lse_row - diag) + (lse_col - diag))
    m = kpt_mask.astype(jnp.float32)
    return jnp.sum(per_kpt * m) / jnp.maximum(jnp.sum(m), 1.0)


if __name__ == "__main__":
    B, N, D = 2, 128, 32
    key = jax.random.PRNGKey(0)
    k1, k2, k3 = jax.random.split(key, 3)
    src_desc = jax.random.normal(k1, (B, N, D), dtype=jnp.float32)
    tgt_desc = src_desc + 0.1 * jax.random.normal(k2, (B, N, D), dtype=jnp.float32)
    kpt_mask = (jax.random.uniform(k3, (B, N)) > 0.2).astype(jnp.float32)

    loss = jax.block_until_ready(corr_loss(src_desc, tgt_desc, kpt_mask))
    loss_ref = jax.block_until_ready(corr_loss_ref(src_desc, tgt_desc, kpt_mask))
    np.testing.assert_allclose(np.asarray(loss), np.asarray(loss_ref),
                               rtol=1e-3, atol=1e-3)
    print("KERNEL_OK")
</pallas_src>

<mosaic_0001>
module attributes {stable_mosaic.version = 11 : i64} {
  func.func @_corr_loss_kernel(%arg0: i32, %arg1: memref<1x128x32xf32, #tpu.memory_space<vmem>>, %arg2: memref<1x128x32xf32, #tpu.memory_space<vmem>>, %arg3: memref<1x1x128xf32, #tpu.memory_space<vmem>>, %arg4: memref<1x2x128xf32, #tpu.memory_space<vmem>>) attributes {dimension_semantics = [#tpu.dimension_semantics<parallel>], iteration_bounds = array<i64: 2>, scalar_prefetch = 0 : i64, scratch_operands = 0 : i64, tpu.core_type = #tpu.core_type<tc>, window_params = [{transform_indices = @transform_0, window_bounds = array<i64: 1, 128, 32>}, {transform_indices = @transform_1, window_bounds = array<i64: 1, 128, 32>}, {transform_indices = @transform_2, window_bounds = array<i64: 1, 1, 128>}, {transform_indices = @transform_3, window_bounds = array<i64: 1, 2, 128>}]} {
    %c0 = arith.constant 0 : index
    %c0_0 = arith.constant 0 : index
    %c0_1 = arith.constant 0 : index
    %0 = vector.load %arg1[%c0, %c0_0, %c0_1] : memref<1x128x32xf32, #tpu.memory_space<vmem>>, vector<1x128x32xf32>
    %c0_2 = arith.constant 0 : index
    %c0_3 = arith.constant 0 : index
    %c0_4 = arith.constant 0 : index
    %1 = vector.load %arg2[%c0_2, %c0_3, %c0_4] : memref<1x128x32xf32, #tpu.memory_space<vmem>>, vector<1x128x32xf32>
    %c0_5 = arith.constant 0 : index
    %c0_6 = arith.constant 0 : index
    %c0_7 = arith.constant 0 : index
    %2 = vector.load %arg3[%c0_5, %c0_6, %c0_7] : memref<1x1x128xf32, #tpu.memory_space<vmem>>, vector<1x1x128xf32>
    %3 = vector.shape_cast %2 : vector<1x1x128xf32> to vector<1x128xf32>
    %4 = arith.mulf %0, %0 : vector<1x128x32xf32>
    %cst = arith.constant dense<0.000000e+00> : vector<1x128xf32>
    %5 = vector.multi_reduction <add>, %4, %cst [2] : vector<1x128x32xf32> to vector<1x128xf32>
    %6 = vector.shape_cast %5 : vector<1x128xf32> to vector<1x128x1xf32>
    %cst_8 = arith.constant 9.99999996E-13 : f32
    %7 = vector.broadcast %cst_8 : f32 to vector<1x128x1xf32>
    %8 = arith.addf %6, %7 : vector<1x128x1xf32>
    %9 = math.rsqrt %8 : vector<1x128x1xf32>
    %10 = vector.broadcast %9 : vector<1x128x1xf32> to vector<1x128x32xf32>
    %11 = arith.mulf %0, %10 : vector<1x128x32xf32>
    %12 = arith.mulf %1, %1 : vector<1x128x32xf32>
    %cst_9 = arith.constant dense<0.000000e+00> : vector<1x128xf32>
    %13 = vector.multi_reduction <add>, %12, %cst_9 [2] : vector<1x128x32xf32> to vector<1x128xf32>
    %14 = vector.shape_cast %13 : vector<1x128xf32> to vector<1x128x1xf32>
    %cst_10 = arith.constant 9.99999996E-13 : f32
    %15 = vector.broadcast %cst_10 : f32 to vector<1x128x1xf32>
    %16 = arith.addf %14, %15 : vector<1x128x1xf32>
    %17 = math.rsqrt %16 : vector<1x128x1xf32>
    %18 = vector.broadcast %17 : vector<1x128x1xf32> to vector<1x128x32xf32>
    %19 = arith.mulf %1, %18 : vector<1x128x32xf32>
    %20 = arith.mulf %11, %19 : vector<1x128x32xf32>
    %cst_11 = arith.constant dense<0.000000e+00> : vector<1x128xf32>
    %21 = vector.multi_reduction <add>, %20, %cst_11 [2] : vector<1x128x32xf32> to vector<1x128xf32>
    "tpu.trace_start"() <{level = 10 : i32, message = "bid,bjd->bij"}> : () -> ()
    %cst_12 = arith.constant dense<0.000000e+00> : vector<1x128x128xf32>
    %22 = tpu.matmul %11, %19, %cst_12 {dimension_numbers = #tpu.dot_dimension_numbers<[2], [2], [1], [1], [0, 0, 0, 1, 1, 1], [0], [0]>} : vector<1x128x32xf32>, vector<1x128x32xf32>, vector<1x128x128xf32> -> vector<1x128x128xf32>
    "tpu.trace_stop"() : () -> ()
    %23 = math.exp %22 : vector<1x128x128xf32>
    %cst_13 = arith.constant dense<0.000000e+00> : vector<1x128xf32>
    %24 = vector.multi_reduction <add>, %23, %cst_13 [2] : vector<1x128x128xf32> to vector<1x128xf32>
    %25 = math.log %24 : vector<1x128xf32>
    %cst_14 = arith.constant dense<0.000000e+00> : vector<1x128xf32>
    %26 = vector.multi_reduction <add>, %23, %cst_14 [1] : vector<1x128x128xf32> to vector<1x128xf32>
    %27 = math.log %26 : vector<1x128xf32>
    %28 = arith.addf %25, %27 : vector<1x128xf32>
    %cst_15 = arith.constant 2.000000e+00 : f32
    %29 = vector.broadcast %cst_15 : f32 to vector<1x128xf32>
    %30 = arith.mulf %29, %21 : vector<1x128xf32>
    %31 = arith.subf %28, %30 : vector<1x128xf32>
    %32 = arith.mulf %3, %31 : vector<1x128xf32>
    %33 = vector.shape_cast %32 : vector<1x128xf32> to vector<1x1x128xf32>
    %cst_16 = arith.constant dense<0.000000e+00> : vector<1xf32>
    %34 = vector.multi_reduction <add>, %33, %cst_16 [1, 2] : vector<1x1x128xf32> to vector<1xf32>
    %35 = vector.shape_cast %34 : vector<1xf32> to vector<1x1x1xf32>
    %36 = vector.extract %35[0, 0, 0] : f32 from vector<1x1x1xf32>
    %cst_17 = arith.constant 5.000000e-01 : f32
    %37 = arith.mulf %cst_17, %36 : f32
    %38 = vector.shape_cast %3 : vector<1x128xf32> to vector<1x1x128xf32>
    %cst_18 = arith.constant dense<0.000000e+00> : vector<1xf32>
    %39 = vector.multi_reduction <add>, %38, %cst_18 [1, 2] : vector<1x1x128xf32> to vector<1xf32>
    %40 = vector.shape_cast %39 : vector<1xf32> to vector<1x1x1xf32>
    %41 = vector.extract %40[0, 0, 0] : f32 from vector<1x1x1xf32>
    %42 = tpu.iota {dimensions = array<i32: 1>} : vector<1x2x128xi32>
    %c0_i32 = arith.constant 0 : i32
    %43 = vector.broadcast %c0_i32 : i32 to vector<1x2x128xi32>
    %44 = arith.cmpi eq, %42, %43 : vector<1x2x128xi32>
    %45 = vector.broadcast %37 : f32 to vector<1x2x128xf32>
    %46 = vector.broadcast %41 : f32 to vector<1x2x128xf32>
    %47 = arith.select %44, %45, %46 : vector<1x2x128xi1>, vector<1x2x128xf32>
    %c0_19 = arith.constant 0 : index
    %c0_20 = arith.constant 0 : index
    %c0_21 = arith.constant 0 : index
    %48 = vector.load %arg4[%c0_19, %c0_20, %c0_21] : memref<1x2x128xf32, #tpu.memory_space<vmem>>, vector<1x2x128xf32>
    tpu.vector_store %arg4[%c0_19, %c0_20, %c0_21], %47 {strides = array<i32>} : memref<1x2x128xf32, #tpu.memory_space<vmem>>, vector<1x2x128xf32>,
    return
  }
  func.func @transform_0(%arg0: i32) -> (i32, i32, i32) {
    %c0_i32 = arith.constant 0 : i32
    %c0_i32_0 = arith.constant 0 : i32
    %c0_i32_1 = arith.constant 0 : i32
    return %arg0, %c0_i32, %c0_i32_0 : i32, i32, i32
  }
  func.func @transform_1(%arg0: i32) -> (i32, i32, i32) {
    %c0_i32 = arith.constant 0 : i32
    %c0_i32_0 = arith.constant 0 : i32
    %c0_i32_1 = arith.constant 0 : i32
    return %arg0, %c0_i32, %c0_i32_0 : i32, i32, i32
  }
  func.func @transform_2(%arg0: i32) -> (i32, i32, i32) {
    %c0_i32 = arith.constant 0 : i32
    %c0_i32_0 = arith.constant 0 : i32
    %c0_i32_1 = arith.constant 0 : i32
    return %arg0, %c0_i32, %c0_i32_0 : i32, i32, i32
  }
  func.func @transform_3(%arg0: i32) -> (i32, i32, i32) {
    %c0_i32 = arith.constant 0 : i32
    %c0_i32_0 = arith.constant 0 : i32
    %c0_i32_1 = arith.constant 0 : i32
    return %arg0, %c0_i32, %c0_i32_0 : i32, i32, i32
  }
}

</mosaic_0001>

<llo_original>
// kernel: tpu_custom_call.1
$region0: #{tpu_custom_call.1}
  #allocation0 [shape = 'u32[]', space=smem, size = 0x4, offset = 0x4, fixed_abs, tag = 'smem constant byte address 0x4 - core index']
  #allocation1 [shape = 'u32[144,128]{1,0:T(1,128)}', space=vmem, size = 0x12000, scoped, tag = 'internal scratch']
  %s0 = inlined_call_operand.vmem [shape: f32[2,128,32], index: 0, kind: input, shape index: {}]
  %s1 = inlined_call_operand.vmem [shape: f32[2,128,32], index: 1, kind: input, shape index: {}]
  %s2 = inlined_call_operand.vmem [shape: f32[2,1,128], index: 2, kind: input, shape index: {}]
  %s3 = inlined_call_operand.hbm [shape: f32[2,2,128], index: 3, kind: output, shape index: {}]
  %s4 = sld [smem:[#allocation0]]
  $region45: #{tpu_custom_call.1} parent=0
    _
  %s6 = ssub.s32 1, %s4
  %s7 = scalar_select 0, %s6, %s4
  $region1: #{tpu_custom_call.1} parent=0
    #allocation2 [shape = 'u8[2048]{0}', space=vmem, size = 0x800, scoped, tag = 'output window, operand 0']
    #allocation3 [shape = 's32[2]{0}', space=sflag, size = 0x8, scoped, tag = 'scoped memory for tpu_custom_call.1']
    %8 = vsyncpa [#allocation3], 0
    %s9 = scalar_lea.sflag [#allocation3], 1
    %10 = vsyncpa %s9, 0
    loop: start=0, step=1, limit=4
    $region2: #{tpu_custom_call.1} parent=1 // loop_pre_header
      _
    $region3: #{tpu_custom_call.1} parent=1 // loop_header
      %s12 = sphi 0, %s16
      %p13 = scmp.ge.s32.totalorder %s12, 4
      %s22 = sphi 0, %s24
      %s25 = sphi 0, %s22
      %s26 = sphi 0, %s25
      %s42 = sphi 0, %s26
      %s48 = sphi 0, %s50
      %s51 = sphi 0, %s48
      %s52 = sphi 0, %s51
      %s68 = sphi 0, %s52
      %s74 = sphi 0, %s76
      %s77 = sphi 0, %s74
      %s78 = sphi 0, %s77
      %s94 = sphi 0, %s78
      %s100 = sphi 0, %s102
      %s103 = sphi 0, %s100
      %s104 = sphi 0, %s103
      %s120 = sphi 0, %s104
    $region4: #{tpu_custom_call.1} parent=1 // loop_header_branch
      %15 = sbr.rel (%p13) target = $region8
    $region5: #{tpu_custom_call.1} parent=1 // loop_body
      %s17 = ssub.s32 %s12, 1
      %s18 = ssub.s32 %s12, 2
      %s19 = sadd.s32 %s12, 1
      %s20 = ssub.s32 %s12, %s19
      %p21 = scmp.eq.s32.totalorder %s20, 0
      %s23 = sadd.s32 %s22, 1
      %s24 = scalar_select %p21, %s22, %s23
      %p27 = pneg %p21
      %p28 = scmp.eq.s32.totalorder %s12, 1
      %p29 = por %p27, %p28
      %p30 = scmp.ne.s32.totalorder %s22, %s25
      %p31 = scmp.eq.s32.totalorder %s12, 0
      %p32 = por %p30, %p31
      %p33 = scmp.ne.s32.totalorder %s22, %s25
      %p34 = scmp.eq.s32.totalorder %s17, 1
      %p35 = por %p33, %p34
      %p36 = scmp.ne.s32.totalorder %s25, %s26
      %p37 = scmp.eq.s32.totalorder %s17, 0
      %p38 = por %p36, %p37
      %p39 = scmp.ne.s32.totalorder %s25, %s26
      %p40 = scmp.eq.s32.totalorder %s18, 1
      %p41 = por %p39, %p40
      %p43 = scmp.ne.s32.totalorder %s26, %s42
      %p44 = scmp.eq.s32.totalorder %s18, 0
      %p45 = por %p43, %p44
      %s46 = ssub.s32 %s12, %s19
      %p47 = scmp.eq.s32.totalorder %s46, 0
      %s49 = sadd.s32 %s48, 1
      %s50 = scalar_select %p47, %s48, %s49
      %p53 = pneg %p47
      %p54 = scmp.eq.s32.totalorder %s12, 1
      %p55 = por %p53, %p54
      %p56 = scmp.ne.s32.totalorder %s48, %s51
      %p57 = scmp.eq.s32.totalorder %s12, 0
      %p58 = por %p56, %p57
      %p59 = scmp.ne.s32.totalorder %s48, %s51
      %p60 = scmp.eq.s32.totalorder %s17, 1
      %p61 = por %p59, %p60
      %p62 = scmp.ne.s32.totalorder %s51, %s52
      %p63 = scmp.eq.s32.totalorder %s17, 0
      %p64 = por %p62, %p63
      %p65 = scmp.ne.s32.totalorder %s51, %s52
      %p66 = scmp.eq.s32.totalorder %s18, 1
      %p67 = por %p65, %p66
      %p69 = scmp.ne.s32.totalorder %s52, %s68
      %p70 = scmp.eq.s32.totalorder %s18, 0
      %p71 = por %p69, %p70
      %s72 = ssub.s32 %s12, %s19
      %p73 = scmp.eq.s32.totalorder %s72, 0
      %s75 = sadd.s32 %s74, 1
      %s76 = scalar_select %p73, %s74, %s75
      %p79 = pneg %p73
      %p80 = scmp.eq.s32.totalorder %s12, 1
      %p81 = por %p79, %p80
      %p82 = scmp.ne.s32.totalorder %s74, %s77
      %p83 = scmp.eq.s32.totalorder %s12, 0
      %p84 = por %p82, %p83
      %p85 = scmp.ne.s32.totalorder %s74, %s77
      %p86 = scmp.eq.s32.totalorder %s17, 1
      %p87 = por %p85, %p86
      %p88 = scmp.ne.s32.totalorder %s77, %s78
      %p89 = scmp.eq.s32.totalorder %s17, 0
      %p90 = por %p88, %p89
      %p91 = scmp.ne.s32.totalorder %s77, %s78
      %p92 = scmp.eq.s32.totalorder %s18, 1
      %p93 = por %p91, %p92
      %p95 = scmp.ne.s32.totalorder %s78, %s94
      %p96 = scmp.eq.s32.totalorder %s18, 0
      %p97 = por %p95, %p96
      %s98 = ssub.s32 %s12, %s19
      %p99 = scmp.eq.s32.totalorder %s98, 0
      %s101 = sadd.s32 %s100, 1
      %s102 = scalar_select %p99, %s100, %s101
      %p105 = pneg %p99
      %p106 = scmp.eq.s32.totalorder %s12, 1
      %p107 = por %p105, %p106
      %p108 = scmp.ne.s32.totalorder %s100, %s103
      %p109 = scmp.eq.s32.totalorder %s12, 0
      %p110 = por %p108, %p109
      %p111 = scmp.ne.s32.totalorder %s100, %s103
      %p112 = scmp.eq.s32.totalorder %s17, 1
      %p113 = por %p111, %p112
      %p114 = scmp.ne.s32.totalorder %s103, %s104
      %p115 = scmp.eq.s32.totalorder %s17, 0
      %p116 = por %p114, %p115
      %p117 = scmp.ne.s32.totalorder %s103, %s104
      %p118 = scmp.eq.s32.totalorder %s18, 1
      %p119 = por %p117, %p118
      %p121 = scmp.ne.s32.totalorder %s104, %s120
      %p122 = scmp.eq.s32.totalorder %s18, 0
      %p123 = por %p121, %p122
      %p124 = scmp.le.s32.totalorder 1, %s12
      %p125 = scmp.lt.s32.totalorder %s12, 3
      %p126 = pnand %p124, %p125
      %p127 = pneg %p126
      // Predicated region
      $region9: #{tpu_custom_call.1} parent=5 // pred_check
        _
      $region10: #{tpu_custom_call.1} parent=5 // pred_check_branch
        %129 = sbr.rel (%p126) target = $region12
      $region11: #{tpu_custom_call.1} parent=5 // pred_region
        %s130 = ssub.s32 %s12, 1
      $region12: #{tpu_custom_call.1} parent=5 // pred_fallthru
        _
      %p131 = scmp.lt.s32.totalorder %s12, 2
      // Predicated region
      $region13: #{tpu_custom_call.1} parent=5 // pred_check
        %p132 = pneg %p131
      $region14: #{tpu_custom_call.1} parent=5 // pred_check_branch
        %134 = sbr.rel (%p132) target = $region16
      $region15: #{tpu_custom_call.1} parent=5 // pred_region
        // Predicated region
        $region17: #{tpu_custom_call.1} parent=15 // pred_check
          %p135 = pneg %p32
        $region18: #{tpu_custom_call.1} parent=15 // pred_check_branch
          %137 = sbr.rel (%p135) target = $region20
        $region19: #{tpu_custom_call.1} parent=15 // pred_region
          %p138 = scmp.lt.s32.totalorder %s12, 1
          %s139 = scalar_select %p138, %s12, 1
          %s140 = smul.addr %s139, 16
          %s141 = smul.addr %s140, 8
          %s142 = scalar_lea.vmem %s0, %s141
        $region20: #{tpu_custom_call.1} parent=15 // pred_fallthru
          _
        // Predicated region
        $region21: #{tpu_custom_call.1} parent=15 // pred_check
          %p143 = pneg %p58
        $region22: #{tpu_custom_call.1} parent=15 // pred_check_branch
          %145 = sbr.rel (%p143) target = $region24
        $region23: #{tpu_custom_call.1} parent=15 // pred_region
          %p146 = scmp.lt.s32.totalorder %s12, 1
          %s147 = scalar_select %p146, %s12, 1
          %s148 = smul.addr %s147, 16
          %s149 = smul.addr %s148, 8
          %s150 = scalar_lea.vmem %s1, %s149
        $region24: #{tpu_custom_call.1} parent=15 // pred_fallthru
          _
        // Predicated region
        $region25: #{tpu_custom_call.1} parent=15 // pred_check
          %p151 = pneg %p84
        $region26: #{tpu_custom_call.1} parent=15 // pred_check_branch
          %153 = sbr.rel (%p151) target = $region28
        $region27: #{tpu_custom_call.1} parent=15 // pred_region
          %p154 = scmp.lt.s32.totalorder %s12, 1
          %s155 = scalar_select %p154, %s12, 1
          %s156 = scalar_lea.vmem %s2, %s155
        $region28: #{tpu_custom_call.1} parent=15 // pred_fallthru
          _
      $region16: #{tpu_custom_call.1} parent=5 // pred_fallthru
        _
      %p157 = scmp.le.s32.totalorder 1, %s12
      %p158 = scmp.lt.s32.totalorder %s12, 3
      %p159 = pnand %p157, %p158
      %p160 = pneg %p159
      // Predicated region
      $region29: #{tpu_custom_call.1} parent=5 // pred_check
        _
      $region30: #{tpu_custom_call.1} parent=5 // pred_check_branch
        %162 = sbr.rel (%p159) target = $region32
      $region31: #{tpu_custom_call.1} parent=5 // pred_region
        %s163 = ssub.s32 %s12, 1
        %p164 = scmp.lt.s32.totalorder %s17, 1
        %s165 = scalar_select %p164, %s17, 1
        %s166 = smul.addr %s165, 16
        %s167 = smul.addr %s166, 8
        %s168 = scalar_lea.vmem %s0, %s167
        %p169 = pneg %p38
        %p170 = pneg %p35
        %p171 = scmp.lt.s32.totalorder %s17, 1
        %s172 = scalar_select %p171, %s17, 1
        %s173 = smul.addr %s172, 16
        %s174 = smul.addr %s173, 8
        %s175 = scalar_lea.vmem %s1, %s174
        %p176 = pneg %p64
        %p177 = pneg %p61
        %p178 = scmp.lt.s32.totalorder %s17, 1
        %s179 = scalar_select %p178, %s17, 1
        %s180 = scalar_lea.vmem %s2, %s179
        %p181 = pneg %p90
        %p182 = pneg %p87
        %p183 = pneg %p116
        %p184 = pneg %p113
        %s185 = sand.u32 %s103, 1
        %s186 = scalar_lea.sflag [#allocation3], %s185
        %s187 = sand.u32 %s103, 1
        %s188 = smul.addr %s187, 2
        %s189 = scalar_lea.vmem [#allocation2], %s188
        %p190 = scmp.lt.s32.totalorder %s17, 1
        %s191 = scalar_select %p190, %s17, 1
        %s192 = smul.addr %s191, 16
        %s193 = smul.addr %s192, 8
        %s194 = scalar_lea.vmem %s0, %s193
        %p195 = scmp.lt.s32.totalorder %s17, 1
        %s196 = scalar_select %p195, %s17, 1
        %s197 = smul.addr %s196, 16
        %s198 = smul.addr %s197, 8
        %s199 = scalar_lea.vmem %s1, %s198
        %p200 = scmp.lt.s32.totalorder %s17, 1
        %s201 = scalar_select %p200, %s17, 1
        %s202 = scalar_lea.vmem %s2, %s201
        %v203 = vld [vmem:[%s194] sm:$0xff]
        %v204 = vld [vmem:[%s194 + $0x8] sm:$0xff]
        %v205 = vld [vmem:[%s194 + $0x10] sm:$0xff]
        %v206 = vld [vmem:[%s194 + $0x18] sm:$0xff]
        %v207 = vld [vmem:[%s194 + $0x20] sm:$0xff]
        %v208 = vld [vmem:[%s194 + $0x28] sm:$0xff]
        %v209 = vld [vmem:[%s194 + $0x30] sm:$0xff]
        %v210 = vld [vmem:[%s194 + $0x38] sm:$0xff]
        %v211 = vld [vmem:[%s194 + $0x40] sm:$0xff]
        %v212 = vld [vmem:[%s194 + $0x48] sm:$0xff]
        %v213 = vld [vmem:[%s194 + $0x50] sm:$0xff]
        %v214 = vld [vmem:[%s194 + $0x58] sm:$0xff]
        %v215 = vld [vmem:[%s194 + $0x60] sm:$0xff]
        %v216 = vld [vmem:[%s194 + $0x68] sm:$0xff]
        %v217 = vld [vmem:[%s194 + $0x70] sm:$0xff]
        %v218 = vld [vmem:[%s194 + $0x78] sm:$0xff]
        %v219 = vld [vmem:[%s199] sm:$0xff]
        %v220 = vld [vmem:[%s199 + $0x8] sm:$0xff]
        %v221 = vld [vmem:[%s199 + $0x10] sm:$0xff]
        %v222 = vld [vmem:[%s199 + $0x18] sm:$0xff]
        %v223 = vld [vmem:[%s199 + $0x20] sm:$0xff]
        %v224 = vld [vmem:[%s199 + $0x28] sm:$0xff]
        %v225 = vld [vmem:[%s199 + $0x30] sm:$0xff]
        %v226 = vld [vmem:[%s199 + $0x38] sm:$0xff]
        %v227 = vld [vmem:[%s199 + $0x40] sm:$0xff]
        %v228 = vld [vmem:[%s199 + $0x48] sm:$0xff]
        %v229 = vld [vmem:[%s199 + $0x50] sm:$0xff]
        %v230 = vld [vmem:[%s199 + $0x58] sm:$0xff]
        %v231 = vld [vmem:[%s199 + $0x60] sm:$0xff]
        %v232 = vld [vmem:[%s199 + $0x68] sm:$0xff]
        %v233 = vld [vmem:[%s199 + $0x70] sm:$0xff]
        %v234 = vld [vmem:[%s199 + $0x78] sm:$0xff]
        %v235 = vld [vmem:[%s202] sm:$0x1]
        %v236 = vmul.f32 %v203, %v203
        %v237 = vmul.f32 %v204, %v204
        %v238 = vmul.f32 %v205, %v205
        %v239 = vmul.f32 %v206, %v206
        %v240 = vmul.f32 %v207, %v207
        %v241 = vmul.f32 %v208, %v208
        %v242 = vmul.f32 %v209, %v209
        %v243 = vmul.f32 %v210, %v210
        %v244 = vmul.f32 %v211, %v211
        %v245 = vmul.f32 %v212, %v212
        %v246 = vmul.f32 %v213, %v213
        %v247 = vmul.f32 %v214, %v214
        %v248 = vmul.f32 %v215, %v215
        %v249 = vmul.f32 %v216, %v216
        %v250 = vmul.f32 %v217, %v217
        %v251 = vmul.f32 %v218, %v218
        %vm252 = vcmask 261120
        %v253 = vsel %vm252, %v236, 0.0
        %254 = vadd.xlane.f32.xlu0 %v253
        %v255 = vpop.xlane.xlu0 %254
        %v256 = vsel %vm252, %v237, 0.0
        %257 = vadd.xlane.f32.xlu0 %v256
        %v258 = vpop.xlane.xlu0 %257
        %v259 = vsel %vm252, %v238, 0.0
        %260 = vadd.xlane.f32.xlu0 %v259
        %v261 = vpop.xlane.xlu0 %260
        %v262 = vsel %vm252, %v239, 0.0
        %263 = vadd.xlane.f32.xlu0 %v262
        %v264 = vpop.xlane.xlu0 %263
        %v265 = vsel %vm252, %v240, 0.0
        %266 = vadd.xlane.f32.xlu0 %v265
        %v267 = vpop.xlane.xlu0 %266
        %v268 = vsel %vm252, %v241, 0.0
        %269 = vadd.xlane.f32.xlu0 %v268
        %v270 = vpop.xlane.xlu0 %269
        %v271 = vsel %vm252, %v242, 0.0
        %272 = vadd.xlane.f32.xlu0 %v271
        %v273 = vpop.xlane.xlu0 %272
        %v274 = vsel %vm252, %v243, 0.0
        %275 = vadd.xlane.f32.xlu0 %v274
        %v276 = vpop.xlane.xlu0 %275
        %v277 = vsel %vm252, %v244, 0.0
        %278 = vadd.xlane.f32.xlu0 %v277
        %v279 = vpop.xlane.xlu0 %278
        %v280 = vsel %vm252, %v245, 0.0
        %281 = vadd.xlane.f32.xlu0 %v280
        %v282 = vpop.xlane.xlu0 %281
        %v283 = vsel %vm252, %v246, 0.0
        %284 = vadd.xlane.f32.xlu0 %v283
        %v285 = vpop.xlane.xlu0 %284
        %v286 = vsel %vm252, %v247, 0.0
        %287 = vadd.xlane.f32.xlu0 %v286
        %v288 = vpop.xlane.xlu0 %287
        %v289 = vsel %vm252, %v248, 0.0
        %290 = vadd.xlane.f32.xlu0 %v289
        %v291 = vpop.xlane.xlu0 %290
        %v292 = vsel %vm252, %v249, 0.0
        %293 = vadd.xlane.f32.xlu0 %v292
        %v294 = vpop.xlane.xlu0 %293
        %v295 = vsel %vm252, %v250, 0.0
        %296 = vadd.xlane.f32.xlu0 %v295
        %v297 = vpop.xlane.xlu0 %296
        %v298 = vsel %vm252, %v251, 0.0
        %299 = vadd.xlane.f32.xlu0 %v298
        %v300 = vpop.xlane.xlu0 %299
        %v301 = vadd.f32 %v255, 1e-12
        %v302 = vadd.f32 %v258, 1e-12
        %v303 = vadd.f32 %v261, 1e-12
        %v304 = vadd.f32 %v264, 1e-12
        %v305 = vadd.f32 %v267, 1e-12
        %v306 = vadd.f32 %v270, 1e-12
        %v307 = vadd.f32 %v273, 1e-12
        %v308 = vadd.f32 %v276, 1e-12
        %v309 = vadd.f32 %v279, 1e-12
        %v310 = vadd.f32 %v282, 1e-12
        %v311 = vadd.f32 %v285, 1e-12
        %v312 = vadd.f32 %v288, 1e-12
        %v313 = vadd.f32 %v291, 1e-12
        %v314 = vadd.f32 %v294, 1e-12
        %v315 = vadd.f32 %v297, 1e-12
        %v316 = vadd.f32 %v300, 1e-12
        %v317 = vrsqrt.pop %v301
        %v318 = vrsqrt.pop %v302
        %v319 = vrsqrt.pop %v303
        %v320 = vrsqrt.pop %v304
        %v321 = vrsqrt.pop %v305
        %v322 = vrsqrt.pop %v306
        %v323 = vrsqrt.pop %v307
        %v324 = vrsqrt.pop %v308
        %v325 = vrsqrt.pop %v309
        %v326 = vrsqrt.pop %v310
        %v327 = vrsqrt.pop %v311
        %v328 = vrsqrt.pop %v312
        %v329 = vrsqrt.pop %v313
        %v330 = vrsqrt.pop %v314
        %v331 = vrsqrt.pop %v315
        %v332 = vrsqrt.pop %v316
        %v333 = vmul.f32 %v203, %v317
        %v334 = vmul.f32 %v204, %v318
        %v335 = vmul.f32 %v205, %v319
        %v336 = vmul.f32 %v206, %v320
        %v337 = vmul.f32 %v207, %v321
        %v338 = vmul.f32 %v208, %v322
        %v339 = vmul.f32 %v209, %v323
        %v340 = vmul.f32 %v210, %v324
        %v341 = vmul.f32 %v211, %v325
        %v342 = vmul.f32 %v212, %v326
        %v343 = vmul.f32 %v213, %v327
        %v344 = vmul.f32 %v214, %v328
        %v345 = vmul.f32 %v215, %v329
        %v346 = vmul.f32 %v216, %v330
        %v347 = vmul.f32 %v217, %v331
        %v348 = vmul.f32 %v218, %v332
        %v349 = vmul.f32 %v219, %v219
        %v350 = vmul.f32 %v220, %v220
        %v351 = vmul.f32 %v221, %v221
        %v352 = vmul.f32 %v222, %v222
        %v353 = vmul.f32 %v223, %v223
        %v354 = vmul.f32 %v224, %v224
        %v355 = vmul.f32 %v225, %v225
        %v356 = vmul.f32 %v226, %v226
        %v357 = vmul.f32 %v227, %v227
        %v358 = vmul.f32 %v228, %v228
        %v359 = vmul.f32 %v229, %v229
        %v360 = vmul.f32 %v230, %v230
        %v361 = vmul.f32 %v231, %v231
        %v362 = vmul.f32 %v232, %v232
        %v363 = vmul.f32 %v233, %v233
        %v364 = vmul.f32 %v234, %v234
        %v365 = vsel %vm252, %v349, 0.0
        %366 = vadd.xlane.f32.xlu0 %v365
        %v367 = vpop.xlane.xlu0 %366
        %v368 = vsel %vm252, %v350, 0.0
        %369 = vadd.xlane.f32.xlu0 %v368
        %v370 = vpop.xlane.xlu0 %369
        %v371 = vsel %vm252, %v351, 0.0
        %372 = vadd.xlane.f32.xlu0 %v371
        %v373 = vpop.xlane.xlu0 %372
        %v374 = vsel %vm252, %v352, 0.0
        %375 = vadd.xlane.f32.xlu0 %v374
        %v376 = vpop.xlane.xlu0 %375
        %v377 = vsel %vm252, %v353, 0.0
        %378 = vadd.xlane.f32.xlu0 %v377
        %v379 = vpop.xlane.xlu0 %378
        %v380 = vsel %vm252, %v354, 0.0
        %381 = vadd.xlane.f32.xlu0 %v380
        %v382 = vpop.xlane.xlu0 %381
        %v383 = vsel %vm252, %v355, 0.0
        %384 = vadd.xlane.f32.xlu0 %v383
        %v385 = vpop.xlane.xlu0 %384
        %v386 = vsel %vm252, %v356, 0.0
        %387 = vadd.xlane.f32.xlu0 %v386
        %v388 = vpop.xlane.xlu0 %387
        %v389 = vsel %vm252, %v357, 0.0
        %390 = vadd.xlane.f32.xlu0 %v389
        %v391 = vpop.xlane.xlu0 %390
        %v392 = vsel %vm252, %v358, 0.0
        %393 = vadd.xlane.f32.xlu0 %v392
        %v394 = vpop.xlane.xlu0 %393
        %v395 = vsel %vm252, %v359, 0.0
        %396 = vadd.xlane.f32.xlu0 %v395
        %v397 = vpop.xlane.xlu0 %396
        %v398 = vsel %vm252, %v360, 0.0
        %399 = vadd.xlane.f32.xlu0 %v398
        %v400 = vpop.xlane.xlu0 %399
        %v401 = vsel %vm252, %v361, 0.0
        %402 = vadd.xlane.f32.xlu0 %v401
        %v403 = vpop.xlane.xlu0 %402
        %v404 = vsel %vm252, %v362, 0.0
        %405 = vadd.xlane.f32.xlu0 %v404
        %v406 = vpop.xlane.xlu0 %405
        %v407 = vsel %vm252, %v363, 0.0
        %408 = vadd.xlane.f32.xlu0 %v407
        %v409 = vpop.xlane.xlu0 %408
        %v410 = vsel %vm252, %v364, 0.0
        %411 = vadd.xlane.f32.xlu0 %v410
        %v412 = vpop.xlane.xlu0 %411
        %v413 = vadd.f32 %v367, 1e-12
        %v414 = vadd.f32 %v370, 1e-12
        %v415 = vadd.f32 %v373, 1e-12
        %v416 = vadd.f32 %v376, 1e-12
        %v417 = vadd.f32 %v379, 1e-12
        %v418 = vadd.f32 %v382, 1e-12
        %v419 = vadd.f32 %v385, 1e-12
        %v420 = vadd.f32 %v388, 1e-12
        %v421 = vadd.f32 %v391, 1e-12
        %v422 = vadd.f32 %v394, 1e-12
        %v423 = vadd.f32 %v397, 1e-12
        %v424 = vadd.f32 %v400, 1e-12
        %v425 = vadd.f32 %v403, 1e-12
        %v426 = vadd.f32 %v406, 1e-12
        %v427 = vadd.f32 %v409, 1e-12
        %v428 = vadd.f32 %v412, 1e-12
        %v429 = vrsqrt.pop %v413
        %v430 = vrsqrt.pop %v414
        %v431 = vrsqrt.pop %v415
        %v432 = vrsqrt.pop %v416
        %v433 = vrsqrt.pop %v417
        %v434 = vrsqrt.pop %v418
        %v435 = vrsqrt.pop %v419
        %v436 = vrsqrt.pop %v420
        %v437 = vrsqrt.pop %v421
        %v438 = vrsqrt.pop %v422
        %v439 = vrsqrt.pop %v423
        %v440 = vrsqrt.pop %v424
        %v441 = vrsqrt.pop %v425
        %v442 = vrsqrt.pop %v426
        %v443 = vrsqrt.pop %v427
        %v444 = vrsqrt.pop %v428
        %v445 = vmul.f32 %v219, %v429
        %v446 = vmul.f32 %v220, %v430
        %v447 = vmul.f32 %v221, %v431
        %v448 = vmul.f32 %v222, %v432
        %v449 = vmul.f32 %v223, %v433
        %v450 = vmul.f32 %v224, %v434
        %v451 = vmul.f32 %v225, %v435
        %v452 = vmul.f32 %v226, %v436
        %v453 = vmul.f32 %v227, %v437
        %v454 = vmul.f32 %v228, %v438
        %v455 = vmul.f32 %v229, %v439
        %v456 = vmul.f32 %v230, %v440
        %v457 = vmul.f32 %v231, %v441
        %v458 = vmul.f32 %v232, %v442
        %v459 = vmul.f32 %v233, %v443
        %v460 = vmul.f32 %v234, %v444
        %v461 = vmul.f32 %v333, %v445
        %v462 = vmul.f32 %v334, %v446
        %v463 = vmul.f32 %v335, %v447
        %v464 = vmul.f32 %v336, %v448
        %v465 = vmul.f32 %v337, %v449
        %v466 = vmul.f32 %v338, %v450
        %v467 = vmul.f32 %v339, %v451
        %v468 = vmul.f32 %v340, %v452
        %v469 = vmul.f32 %v341, %v453
        %v470 = vmul.f32 %v342, %v454
        %v471 = vmul.f32 %v343, %v455
        %v472 = vmul.f32 %v344, %v456
        %v473 = vmul.f32 %v345, %v457
        %v474 = vmul.f32 %v346, %v458
        %v475 = vmul.f32 %v347, %v459
        %v476 = vmul.f32 %v348, %v460
        %v477 = vsel %vm252, %v461, 0.0
        %478 = vadd.xlane.f32.xlu0 %v477
        %v479 = vpop.xlane.xlu0 %478
        %v480 = vsel %vm252, %v462, 0.0
        %481 = vadd.xlane.f32.xlu0 %v480
        %v482 = vpop.xlane.xlu0 %481
        %v483 = vsel %vm252, %v463, 0.0
        %484 = vadd.xlane.f32.xlu0 %v483
        %v485 = vpop.xlane.xlu0 %484
        %v486 = vsel %vm252, %v464, 0.0
        %487 = vadd.xlane.f32.xlu0 %v486
        %v488 = vpop.xlane.xlu0 %487
        %v489 = vsel %vm252, %v465, 0.0
        %490 = vadd.xlane.f32.xlu0 %v489
        %v491 = vpop.xlane.xlu0 %490
        %v492 = vsel %vm252, %v466, 0.0
        %493 = vadd.xlane.f32.xlu0 %v492
        %v494 = vpop.xlane.xlu0 %493
        %v495 = vsel %vm252, %v467, 0.0
        %496 = vadd.xlane.f32.xlu0 %v495
        %v497 = vpop.xlane.xlu0 %496
        %v498 = vsel %vm252, %v468, 0.0
        %499 = vadd.xlane.f32.xlu0 %v498
        %v500 = vpop.xlane.xlu0 %499
        %v501 = vsel %vm252, %v469, 0.0
        %502 = vadd.xlane.f32.xlu0 %v501
        %v503 = vpop.xlane.xlu0 %502
        %v504 = vsel %vm252, %v470, 0.0
        %505 = vadd.xlane.f32.xlu0 %v504
        %v506 = vpop.xlane.xlu0 %505
        %v507 = vsel %vm252, %v471, 0.0
        %508 = vadd.xlane.f32.xlu0 %v507
        %v509 = vpop.xlane.xlu0 %508
        %v510 = vsel %vm252, %v472, 0.0
        %511 = vadd.xlane.f32.xlu0 %v510
        %v512 = vpop.xlane.xlu0 %511
        %v513 = vsel %vm252, %v473, 0.0
        %514 = vadd.xlane.f32.xlu0 %v513
        %v515 = vpop.xlane.xlu0 %514
        %v516 = vsel %vm252, %v474, 0.0
        %517 = vadd.xlane.f32.xlu0 %v516
        %v518 = vpop.xlane.xlu0 %517
        %v519 = vsel %vm252, %v475, 0.0
        %520 = vadd.xlane.f32.xlu0 %v519
        %v521 = vpop.xlane.xlu0 %520
        %v522 = vsel %vm252, %v476, 0.0
        %523 = vadd.xlane.f32.xlu0 %v522
        %v524 = vpop.xlane.xlu0 %523
        %v526 = vsel %vm252, %v333, 0
        %v529 = vsel %vm252, %v334, 0
        %v532 = vsel %vm252, %v335, 0
        %v535 = vsel %vm252, %v336, 0
        %v538 = vsel %vm252, %v337, 0
        %v541 = vsel %vm252, %v338, 0
        %v544 = vsel %vm252, %v339, 0
        %v547 = vsel %vm252, %v340, 0
        %v550 = vsel %vm252, %v341, 0
        %v553 = vsel %vm252, %v342, 0
        %v556 = vsel %vm252, %v343, 0
        %v559 = vsel %vm252, %v344, 0
        %v562 = vsel %vm252, %v345, 0
        %v565 = vsel %vm252, %v346, 0
        %v568 = vsel %vm252, %v347, 0
        %v571 = vsel %vm252, %v348, 0
        %v574 = vsel %vm252, %v445, 0
        %v577 = vsel %vm252, %v446, 0
        %v580 = vsel %vm252, %v447, 0
        %v583 = vsel %vm252, %v448, 0
        %v586 = vsel %vm252, %v449, 0
        %v589 = vsel %vm252, %v450, 0
        %v592 = vsel %vm252, %v451, 0
        %v595 = vsel %vm252, %v452, 0
        %v598 = vsel %vm252, %v453, 0
        %v601 = vsel %vm252, %v454, 0
        %v604 = vsel %vm252, %v455, 0
        %v607 = vsel %vm252, %v456, 0
        %v610 = vsel %vm252, %v457, 0
        %v613 = vsel %vm252, %v458, 0
        %v616 = vsel %vm252, %v459, 0
        %v619 = vsel %vm252, %v460, 0
        %621 = vmatprep.subr.mxu0 0.0
        %622 = vmatpush1.xpose.msra.mxu0 %v619
        %623 = vmatprep.subr.mxu0 0.0
        %624 = vmatpush1.xpose.msra.mxu0 %v616
        %625 = vmatprep.subr.mxu0 0.0
        %626 = vmatpush1.xpose.msra.mxu0 %v613
        %627 = vmatprep.subr.mxu0 0.0
        %628 = vmatpush1.xpose.msra.mxu0 %v610
        %629 = vmatprep.subr.mxu0 0.0
        %630 = vmatpush1.xpose.msra.mxu0 %v607
        %631 = vmatprep.subr.mxu0 0.0
        %632 = vmatpush1.xpose.msra.mxu0 %v604
        %633 = vmatprep.subr.mxu0 0.0
        %634 = vmatpush1.xpose.msra.mxu0 %v601
        %635 = vmatprep.subr.mxu0 0.0
        %636 = vmatpush1.xpose.msra.mxu0 %v598
        %637 = vmatprep.subr.mxu0 0.0
        %638 = vmatpush1.xpose.msra.mxu0 %v595
        %639 = vmatprep.subr.mxu0 0.0
        %640 = vmatpush1.xpose.msra.mxu0 %v592
        %641 = vmatprep.subr.mxu0 0.0
        %642 = vmatpush1.xpose.msra.mxu0 %v589
        %643 = vmatprep.subr.mxu0 0.0
        %644 = vmatpush1.xpose.msra.mxu0 %v586
        %645 = vmatprep.subr.mxu0 0.0
        %646 = vmatpush1.xpose.msra.mxu0 %v583
        %647 = vmatprep.subr.mxu0 0.0
        %648 = vmatpush1.xpose.msra.mxu0 %v580
        %649 = vmatprep.subr.mxu0 0.0
        %650 = vmatpush1.xpose.msra.mxu0 %v577
        %651 = vmatprep.subr.mxu0 0.0
        %652 = vmatpush1.xpose.msra.mxu0 %v574
        %653 = vmatprep.subr.mxu0 0.0
        %654 = vmatpush2.xpose.msra.mxu0 0.0
        %655 = vmatprep.subr.mxu0 0.0
        %656 = vmatpush2.xpose.msra.mxu0 0.0
        %657 = vmatprep.subr.mxu0 0.0
        %658 = vmatpush2.xpose.msra.mxu0 0.0
        %659 = vmatprep.subr.mxu0 0.0
        %660 = vmatpush2.xpose.msra.mxu0 0.0
        %661 = vmatprep.subr.mxu0 0.0
        %662 = vmatpush2.xpose.msra.mxu0 0.0
        %663 = vmatprep.subr.mxu0 0.0
        %664 = vmatpush2.xpose.msra.mxu0 0.0
        %665 = vmatprep.subr.mxu0 0.0
        %666 = vmatpush2.xpose.msra.mxu0 0.0
        %667 = vmatprep.subr.mxu0 0.0
        %668 = vmatpush2.xpose.msra.mxu0 0.0
        %669 = vmatprep.subr.mxu0 0.0
        %670 = vmatpush2.xpose.msra.mxu0 0.0
        %671 = vmatprep.subr.mxu0 0.0
        %672 = vmatpush2.xpose.msra.mxu0 0.0
        %673 = vmatprep.subr.mxu0 0.0
        %674 = vmatpush2.xpose.msra.mxu0 0.0
        %675 = vmatprep.subr.mxu0 0.0
        %676 = vmatpush2.xpose.msra.mxu0 0.0
        %677 = vmatprep.subr.mxu0 0.0
        %678 = vmatpush2.xpose.msra.mxu0 0.0
        %679 = vmatprep.subr.mxu0 0.0
        %680 = vmatpush2.xpose.msra.mxu0 0.0
        %681 = vmatprep.subr.mxu0 0.0
        %682 = vmatpush2.xpose.msra.mxu0 0.0
        %683 = vmatprep.subr.mxu0 0.0
        %684 = vmatpush2.xpose.msra.mxu0 0.0
        %685 = vmatprep.mubr.f32.mxu0 0.0
        %686 = vmatmul.mubr.f32.gmra.mxu0 %v526
        %v687 = vpop.f32.mrf.mxu0
        %v688 = vadd.f32 0.0, %v687
        %v689 = vpop.f32.mrf.mxu0
        %690 = vmatprep.mubr.f32.mxu0 0.0
        %691 = vmatmul.mubr.f32.gmra.mxu0 %v529
        %v692 = vpop.f32.mrf.mxu0
        %v693 = vadd.f32 0.0, %v692
        %v694 = vpop.f32.mrf.mxu0
        %695 = vmatprep.mubr.f32.mxu0 0.0
        %696 = vmatmul.mubr.f32.gmra.mxu0 %v532
        %v697 = vpop.f32.mrf.mxu0
        %v698 = vadd.f32 0.0, %v697
        %v699 = vpop.f32.mrf.mxu0
        %700 = vmatprep.mubr.f32.mxu0 0.0
        %701 = vmatmul.mubr.f32.gmra.mxu0 %v535
        %v702 = vpop.f32.mrf.mxu0
        %v703 = vadd.f32 0.0, %v702
        %v704 = vpop.f32.mrf.mxu0
        %705 = vmatprep.mubr.f32.mxu0 0.0
        %706 = vmatmul.mubr.f32.gmra.mxu0 %v538
        %v707 = vpop.f32.mrf.mxu0
        %v708 = vadd.f32 0.0, %v707
        %v709 = vpop.f32.mrf.mxu0
        %710 = vmatprep.mubr.f32.mxu0 0.0
        %711 = vmatmul.mubr.f32.gmra.mxu0 %v541
        %v712 = vpop.f32.mrf.mxu0
        %v713 = vadd.f32 0.0, %v712
        %v714 = vpop.f32.mrf.mxu0
        %715 = vmatprep.mubr.f32.mxu0 0.0
        %716 = vmatmul.mubr.f32.gmra.mxu0 %v544
        %v717 = vpop.f32.mrf.mxu0
        %v718 = vadd.f32 0.0, %v717
        %v719 = vpop.f32.mrf.mxu0
        %720 = vmatprep.mubr.f32.mxu0 0.0
        %721 = vmatmul.mubr.f32.gmra.mxu0 %v547
        %v722 = vpop.f32.mrf.mxu0
        %v723 = vadd.f32 0.0, %v722
        %v724 = vpop.f32.mrf.mxu0
        %725 = vmatprep.mubr.f32.mxu0 0.0
        %726 = vmatmul.mubr.f32.gmra.mxu0 %v550
        %v727 = vpop.f32.mrf.mxu0
        %v728 = vadd.f32 0.0, %v727
        %v729 = vpop.f32.mrf.mxu0
        %730 = vmatprep.mubr.f32.mxu0 0.0
        %731 = vmatmul.mubr.f32.gmra.mxu0 %v553
        %v732 = vpop.f32.mrf.mxu0
        %v733 = vadd.f32 0.0, %v732
        %v734 = vpop.f32.mrf.mxu0
        %735 = vmatprep.mubr.f32.mxu0 0.0
        %736 = vmatmul.mubr.f32.gmra.mxu0 %v556
        %v737 = vpop.f32.mrf.mxu0
        %v738 = vadd.f32 0.0, %v737
        %v739 = vpop.f32.mrf.mxu0
        %740 = vmatprep.mubr.f32.mxu0 0.0
        %741 = vmatmul.mubr.f32.gmra.mxu0 %v559
        %v742 = vpop.f32.mrf.mxu0
        %v743 = vadd.f32 0.0, %v742
        %v744 = vpop.f32.mrf.mxu0
        %745 = vmatprep.mubr.f32.mxu0 0.0
        %746 = vmatmul.mubr.f32.gmra.mxu0 %v562
        %v747 = vpop.f32.mrf.mxu0
        %v748 = vadd.f32 0.0, %v747
        %v749 = vpop.f32.mrf.mxu0
        %750 = vmatprep.mubr.f32.mxu0 0.0
        %751 = vmatmul.mubr.f32.gmra.mxu0 %v565
        %v752 = vpop.f32.mrf.mxu0
        %v753 = vadd.f32 0.0, %v752
        %v754 = vpop.f32.mrf.mxu0
        %755 = vmatprep.mubr.f32.mxu0 0.0
        %756 = vmatmul.mubr.f32.gmra.mxu0 %v568
        %v757 = vpop.f32.mrf.mxu0
        %v758 = vadd.f32 0.0, %v757
        %v759 = vpop.f32.mrf.mxu0
        %760 = vmatprep.mubr.f32.mxu0 0.0
        %761 = vmatmul.mubr.f32.gmra.mxu0 %v571
        %v762 = vpop.f32.mrf.mxu0
        %v763 = vadd.f32 0.0, %v762
        %v764 = vpop.f32.mrf.mxu0
        %765 = vdwg.mxu0
        %v766 = vmul.f32 %v688, 1.442695
        %v767 = vpow.pop %v766
        %v768 = vmul.f32 %v693, 1.442695
        %v769 = vpow.pop %v768
        %v770 = vmul.f32 %v698, 1.442695
        %v771 = vpow.pop %v770
        %v772 = vmul.f32 %v703, 1.442695
        %v773 = vpow.pop %v772
        %v774 = vmul.f32 %v708, 1.442695
        %v775 = vpow.pop %v774
        %v776 = vmul.f32 %v713, 1.442695
        %v777 = vpow.pop %v776
        %v778 = vmul.f32 %v718, 1.442695
        %v779 = vpow.pop %v778
        %v780 = vmul.f32 %v723, 1.442695
        %v781 = vpow.pop %v780
        %v782 = vmul.f32 %v728, 1.442695
        %v783 = vpow.pop %v782
        %v784 = vmul.f32 %v733, 1.442695
        %v785 = vpow.pop %v784
        %v786 = vmul.f32 %v738, 1.442695
        %v787 = vpow.pop %v786
        %v788 = vmul.f32 %v743, 1.442695
        %v789 = vpow.pop %v788
        %v790 = vmul.f32 %v748, 1.442695
        %v791 = vpow.pop %v790
        %v792 = vmul.f32 %v753, 1.442695
        %v793 = vpow.pop %v792
        %v794 = vmul.f32 %v758, 1.442695
        %v795 = vpow.pop %v794
        %v796 = vmul.f32 %v763, 1.442695
        %v797 = vpow.pop %v796
        %798 = vadd.xlane.f32.xlu0 %v767
        %v799 = vpop.xlane.xlu0 %798
        %800 = vadd.xlane.f32.xlu0 %v769
        %v801 = vpop.xlane.xlu0 %800
        %802 = vadd.xlane.f32.xlu0 %v771
        %v803 = vpop.xlane.xlu0 %802
        %804 = vadd.xlane.f32.xlu0 %v773
        %v805 = vpop.xlane.xlu0 %804
        %806 = vadd.xlane.f32.xlu0 %v775
        %v807 = vpop.xlane.xlu0 %806
        %808 = vadd.xlane.f32.xlu0 %v777
        %v809 = vpop.xlane.xlu0 %808
        %810 = vadd.xlane.f32.xlu0 %v779
        %v811 = vpop.xlane.xlu0 %810
        %812 = vadd.xlane.f32.xlu0 %v781
        %v813 = vpop.xlane.xlu0 %812
        %814 = vadd.xlane.f32.xlu0 %v783
        %v815 = vpop.xlane.xlu0 %814
        %816 = vadd.xlane.f32.xlu0 %v785
        %v817 = vpop.xlane.xlu0 %816
        %818 = vadd.xlane.f32.xlu0 %v787
        %v819 = vpop.xlane.xlu0 %818
        %820 = vadd.xlane.f32.xlu0 %v789
        %v821 = vpop.xlane.xlu0 %820
        %822 = vadd.xlane.f32.xlu0 %v791
        %v823 = vpop.xlane.xlu0 %822
        %824 = vadd.xlane.f32.xlu0 %v793
        %v825 = vpop.xlane.xlu0 %824
        %826 = vadd.xlane.f32.xlu0 %v795
        %v827 = vpop.xlane.xlu0 %826
        %828 = vadd.xlane.f32.xlu0 %v797
        %v829 = vpop.xlane.xlu0 %828
        %v830 = vlog2.pop %v799
        %v831 = vmul.f32 %v830, 0.6931472
        %v832 = vlog2.pop %v801
        %v833 = vmul.f32 %v832, 0.6931472
        %v834 = vlog2.pop %v803
        %v835 = vmul.f32 %v834, 0.6931472
        %v836 = vlog2.pop %v805
        %v837 = vmul.f32 %v836, 0.6931472
        %v838 = vlog2.pop %v807
        %v839 = vmul.f32 %v838, 0.6931472
        %v840 = vlog2.pop %v809
        %v841 = vmul.f32 %v840, 0.6931472
        %v842 = vlog2.pop %v811
        %v843 = vmul.f32 %v842, 0.6931472
        %v844 = vlog2.pop %v813
        %v845 = vmul.f32 %v844, 0.6931472
        %v846 = vlog2.pop %v815
        %v847 = vmul.f32 %v846, 0.6931472
        %v848 = vlog2.pop %v817
        %v849 = vmul.f32 %v848, 0.6931472
        %v850 = vlog2.pop %v819
        %v851 = vmul.f32 %v850, 0.6931472
        %v852 = vlog2.pop %v821
        %v853 = vmul.f32 %v852, 0.6931472
        %v854 = vlog2.pop %v823
        %v855 = vmul.f32 %v854, 0.6931472
        %v856 = vlog2.pop %v825
        %v857 = vmul.f32 %v856, 0.6931472
        %v858 = vlog2.pop %v827
        %v859 = vmul.f32 %v858, 0.6931472
        %v860 = vlog2.pop %v829
        %v861 = vmul.f32 %v860, 0.6931472
        %v862 = vadd.f32 %v767, %v769
        %v863 = vadd.f32 %v862, %v771
        %v864 = vadd.f32 %v863, %v773
        %v865 = vadd.f32 %v864, %v775
        %v866 = vadd.f32 %v865, %v777
        %v867 = vadd.f32 %v866, %v779
        %v868 = vadd.f32 %v867, %v781
        %v869 = vadd.f32 %v868, %v783
        %v870 = vadd.f32 %v869, %v785
        %v871 = vadd.f32 %v870, %v787
        %v872 = vadd.f32 %v871, %v789
        %v873 = vadd.f32 %v872, %v791
        %v874 = vadd.f32 %v873, %v793
        %v875 = vadd.f32 %v874, %v795
        %v876 = vadd.f32 %v875, %v797
        %v877 = vrot.slane %v876, 4
        %v878 = vadd.f32 %v876, %v877
        %v879 = vrot.slane %v878, 2
        %v880 = vadd.f32 %v878, %v879
        %v881 = vrot.slane %v880, 1
        %v882 = vadd.f32 %v880, %v881
        %v883 = vlog2.pop %v882
        %v884 = vmul.f32 %v883, 0.6931472
        %887 = vbcast.lane.b32.xlu0 %v884, 256
        %v888 = vpop.permute.xlu0 %887
        %s890 = sor.u32 256, 8
        %891 = vbcast.lane.b32.xlu0 %v884, %s890
        %v892 = vpop.permute.xlu0 %891
        %s894 = sor.u32 256, 16
        %895 = vbcast.lane.b32.xlu0 %v884, %s894
        %v896 = vpop.permute.xlu0 %895
        %s898 = sor.u32 256, 24
        %899 = vbcast.lane.b32.xlu0 %v884, %s898
        %v900 = vpop.permute.xlu0 %899
        %s902 = sor.u32 256, 32
        %903 = vbcast.lane.b32.xlu0 %v884, %s902
        %v904 = vpop.permute.xlu0 %903
        %s906 = sor.u32 256, 40
        %907 = vbcast.lane.b32.xlu0 %v884, %s906
        %v908 = vpop.permute.xlu0 %907
        %s910 = sor.u32 256, 48
        %911 = vbcast.lane.b32.xlu0 %v884, %s910
        %v912 = vpop.permute.xlu0 %911
        %s914 = sor.u32 256, 56
        %915 = vbcast.lane.b32.xlu0 %v884, %s914
        %v916 = vpop.permute.xlu0 %915
        %s918 = sor.u32 256, 64
        %919 = vbcast.lane.b32.xlu0 %v884, %s918
        %v920 = vpop.permute.xlu0 %919
        %s922 = sor.u32 256, 72
        %923 = vbcast.lane.b32.xlu0 %v884, %s922
        %v924 = vpop.permute.xlu0 %923
        %s926 = sor.u32 256, 80
        %927 = vbcast.lane.b32.xlu0 %v884, %s926
        %v928 = vpop.permute.xlu0 %927
        %s930 = sor.u32 256, 88
        %931 = vbcast.lane.b32.xlu0 %v884, %s930
        %v932 = vpop.permute.xlu0 %931
        %s934 = sor.u32 256, 96
        %935 = vbcast.lane.b32.xlu0 %v884, %s934
        %v936 = vpop.permute.xlu0 %935
        %s938 = sor.u32 256, 104
        %939 = vbcast.lane.b32.xlu0 %v884, %s938
        %v940 = vpop.permute.xlu0 %939
        %s942 = sor.u32 256, 112
        %943 = vbcast.lane.b32.xlu0 %v884, %s942
        %v944 = vpop.permute.xlu0 %943
        %s946 = sor.u32 256, 120
        %947 = vbcast.lane.b32.xlu0 %v884, %s946
        %v948 = vpop.permute.xlu0 %947
        %v965 = vadd.f32 %v831, %v888
        %v966 = vadd.f32 %v833, %v892
        %v967 = vadd.f32 %v835, %v896
        %v968 = vadd.f32 %v837, %v900
        %v969 = vadd.f32 %v839, %v904
        %v970 = vadd.f32 %v841, %v908
        %v971 = vadd.f32 %v843, %v912
        %v972 = vadd.f32 %v845, %v916
        %v973 = vadd.f32 %v847, %v920
        %v974 = vadd.f32 %v849, %v924
        %v975 = vadd.f32 %v851, %v928
        %v976 = vadd.f32 %v853, %v932
        %v977 = vadd.f32 %v855, %v936
        %v978 = vadd.f32 %v857, %v940
        %v979 = vadd.f32 %v859, %v944
        %v980 = vadd.f32 %v861, %v948
        %v981 = vmul.f32 %v479, 2.0
        %v982 = vmul.f32 %v482, 2.0
        %v983 = vmul.f32 %v485, 2.0
        %v984 = vmul.f32 %v488, 2.0
        %v985 = vmul.f32 %v491, 2.0
        %v986 = vmul.f32 %v494, 2.0
        %v987 = vmul.f32 %v497, 2.0
        %v988 = vmul.f32 %v500, 2.0
        %v989 = vmul.f32 %v503, 2.0
        %v990 = vmul.f32 %v506, 2.0
        %v991 = vmul.f32 %v509, 2.0
        %v992 = vmul.f32 %v512, 2.0
        %v993 = vmul.f32 %v515, 2.0
        %v994 = vmul.f32 %v518, 2.0
        %v995 = vmul.f32 %v521, 2.0
        %v996 = vmul.f32 %v524, 2.0
        %v997 = vsub.f32 %v965, %v981
        %v998 = vsub.f32 %v966, %v982
        %v999 = vsub.f32 %v967, %v983
        %v1000 = vsub.f32 %v968, %v984
        %v1001 = vsub.f32 %v969, %v985
        %v1002 = vsub.f32 %v970, %v986
        %v1003 = vsub.f32 %v971, %v987
        %v1004 = vsub.f32 %v972, %v988
        %v1005 = vsub.f32 %v973, %v989
        %v1006 = vsub.f32 %v974, %v990
        %v1007 = vsub.f32 %v975, %v991
        %v1008 = vsub.f32 %v976, %v992
        %v1009 = vsub.f32 %v977, %v993
        %v1010 = vsub.f32 %v978, %v994
        %v1011 = vsub.f32 %v979, %v995
        %v1012 = vsub.f32 %v980, %v996
        %v1029 = vcombine.high %v997, %v997
        %v1031 = vunpack.c.l.s4 1966171168
        %v1032 = vunpack.c.0.s8 %v1031
        %v1033 = vlaneseq
        %v1034 = vshrl.u32 %v1033, 7
        %v1035 = vsub.s32 %v1032, %v1034
        %v1036 = vrot.slane %v997, %v1035
        %v1038 = vunpack.c.l.s4 1966171168
        %v1039 = vunpack.c.0.s8 %v1038
        %v1040 = vlaneseq
        %v1041 = vshrl.u32 %v1040, 7
        %v1042 = vsub.s32 %v1039, %v1041
        %v1043 = vrot.slane %v1029, %v1042
        %v1044 = vcombine.high %v1036, %v1036
        %v1045 = vcombine.high %v1043, %v1043
        %v1047 = vunpack.c.l.s4 1966171168
        %v1048 = vunpack.c.0.s8 %v1047
        %v1049 = vlaneseq
        %v1050 = vshrl.u32 %v1049, 7
        %v1051 = vsub.s32 %v1048, %v1050
        %v1052 = vrot.slane %v1036, %v1051
        %v1054 = vunpack.c.l.s4 1966171168
        %v1055 = vunpack.c.0.s8 %v1054
        %v1056 = vlaneseq
        %v1057 = vshrl.u32 %v1056, 7
        %v1058 = vsub.s32 %v1055, %v1057
        %v1059 = vrot.slane %v1043, %v1058
        %v1061 = vunpack.c.l.s4 1966171168
        %v1062 = vunpack.c.0.s8 %v1061
        %v1063 = vlaneseq
        %v1064 = vshrl.u32 %v1063, 7
        %v1065 = vsub.s32 %v1062, %v1064
        %v1066 = vrot.slane %v1044, %v1065
        %v1068 = vunpack.c.l.s4 1966171168
        %v1069 = vunpack.c.0.s8 %v1068
        %v1070 = vlaneseq
        %v1071 = vshrl.u32 %v1070, 7
        %v1072 = vsub.s32 %v1069, %v1071
        %v1073 = vrot.slane %v1045, %v1072
        %v1074 = vcombine.high %v1052, %v1052
        %v1075 = vcombine.high %v1059, %v1059
        %v1076 = vcombine.high %v1066, %v1066
        %v1077 = vcombine.high %v1073, %v1073
        %v1078 = vcombine.high %v998, %v998
        %v1080 = vunpack.c.l.s4 1966171168
        %v1081 = vunpack.c.0.s8 %v1080
        %v1082 = vlaneseq
        %v1083 = vshrl.u32 %v1082, 7
        %v1084 = vsub.s32 %v1081, %v1083
        %v1085 = vrot.slane %v998, %v1084
        %v1087 = vunpack.c.l.s4 1966171168
        %v1088 = vunpack.c.0.s8 %v1087
        %v1089 = vlaneseq
        %v1090 = vshrl.u32 %v1089, 7
        %v1091 = vsub.s32 %v1088, %v1090
        %v1092 = vrot.slane %v1078, %v1091
        %v1093 = vcombine.high %v1085, %v1085
        %v1094 = vcombine.high %v1092, %v1092
        %v1096 = vunpack.c.l.s4 1966171168
        %v1097 = vunpack.c.0.s8 %v1096
        %v1098 = vlaneseq
        %v1099 = vshrl.u32 %v1098, 7
        %v1100 = vsub.s32 %v1097, %v1099
        %v1101 = vrot.slane %v1085, %v1100
        %v1103 = vunpack.c.l.s4 1966171168
        %v1104 = vunpack.c.0.s8 %v1103
        %v1105 = vlaneseq
        %v1106 = vshrl.u32 %v1105, 7
        %v1107 = vsub.s32 %v1104, %v1106
        %v1108 = vrot.slane %v1092, %v1107
        %v1110 = vunpack.c.l.s4 1966171168
        %v1111 = vunpack.c.0.s8 %v1110
        %v1112 = vlaneseq
        %v1113 = vshrl.u32 %v1112, 7
        %v1114 = vsub.s32 %v1111, %v1113
        %v1115 = vrot.slane %v1093, %v1114
        %v1117 = vunpack.c.l.s4 1966171168
        %v1118 = vunpack.c.0.s8 %v1117
        %v1119 = vlaneseq
        %v1120 = vshrl.u32 %v1119, 7
        %v1121 = vsub.s32 %v1118, %v1120
        %v1122 = vrot.slane %v1094, %v1121
        %v1123 = vcombine.high %v1101, %v1101
        %v1124 = vcombine.high %v1108, %v1108
        %v1125 = vcombine.high %v1115, %v1115
        %v1126 = vcombine.high %v1122, %v1122
        %v1127 = vcombine.high %v999, %v999
        %v1129 = vunpack.c.l.s4 1966171168
        %v1130 = vunpack.c.0.s8 %v1129
        %v1131 = vlaneseq
        %v1132 = vshrl.u32 %v1131, 7
        %v1133 = vsub.s32 %v1130, %v1132
        %v1134 = vrot.slane %v999, %v1133
        %v1136 = vunpack.c.l.s4 1966171168
        %v1137 = vunpack.c.0.s8 %v1136
        %v1138 = vlaneseq
        %v1139 = vshrl.u32 %v1138, 7
        %v1140 = vsub.s32 %v1137, %v1139
        %v1141 = vrot.slane %v1127, %v1140
        %v1142 = vcombine.high %v1134, %v1134
        %v1143 = vcombine.high %v1141, %v1141
        %v1145 = vunpack.c.l.s4 1966171168
        %v1146 = vunpack.c.0.s8 %v1145
        %v1147 = vlaneseq
        %v1148 = vshrl.u32 %v1147, 7
        %v1149 = vsub.s32 %v1146, %v1148
        %v1150 = vrot.slane %v1134, %v1149
        %v1152 = vunpack.c.l.s4 1966171168
        %v1153 = vunpack.c.0.s8 %v1152
        %v1154 = vlaneseq
        %v1155 = vshrl.u32 %v1154, 7
        %v1156 = vsub.s32 %v1153, %v1155
        %v1157 = vrot.slane %v1141, %v1156
        %v1159 = vunpack.c.l.s4 1966171168
        %v1160 = vunpack.c.0.s8 %v1159
        %v1161 = vlaneseq
        %v1162 = vshrl.u32 %v1161, 7
        %v1163 = vsub.s32 %v1160, %v1162
        %v1164 = vrot.slane %v1142, %v1163
        %v1166 = vunpack.c.l.s4 1966171168
        %v1167 = vunpack.c.0.s8 %v1166
        %v1168 = vlaneseq
        %v1169 = vshrl.u32 %v1168, 7
        %v1170 = vsub.s32 %v1167, %v1169
        %v1171 = vrot.slane %v1143, %v1170
        %v1172 = vcombine.high %v1150, %v1150
        %v1173 = vcombine.high %v1157, %v1157
        %v1174 = vcombine.high %v1164, %v1164
        %v1175 = vcombine.high %v1171, %v1171
        %v1176 = vcombine.high %v1000, %v1000
        %v1178 = vunpack.c.l.s4 1966171168
        %v1179 = vunpack.c.0.s8 %v1178
        %v1180 = vlaneseq
        %v1181 = vshrl.u32 %v1180, 7
        %v1182 = vsub.s32 %v1179, %v1181
        %v1183 = vrot.slane %v1000, %v1182
        %v1185 = vunpack.c.l.s4 1966171168
        %v1186 = vunpack.c.0.s8 %v1185
        %v1187 = vlaneseq
        %v1188 = vshrl.u32 %v1187, 7
        %v1189 = vsub.s32 %v1186, %v1188
        %v1190 = vrot.slane %v1176, %v1189
        %v1191 = vcombine.high %v1183, %v1183
        %v1192 = vcombine.high %v1190, %v1190
        %v1194 = vunpack.c.l.s4 1966171168
        %v1195 = vunpack.c.0.s8 %v1194
        %v1196 = vlaneseq
        %v1197 = vshrl.u32 %v1196, 7
        %v1198 = vsub.s32 %v1195, %v1197
        %v1199 = vrot.slane %v1183, %v1198
        %v1201 = vunpack.c.l.s4 1966171168
        %v1202 = vunpack.c.0.s8 %v1201
        %v1203 = vlaneseq
        %v1204 = vshrl.u32 %v1203, 7
        %v1205 = vsub.s32 %v1202, %v1204
        %v1206 = vrot.slane %v1190, %v1205
        %v1208 = vunpack.c.l.s4 1966171168
        %v1209 = vunpack.c.0.s8 %v1208
        %v1210 = vlaneseq
        %v1211 = vshrl.u32 %v1210, 7
        %v1212 = vsub.s32 %v1209, %v1211
        %v1213 = vrot.slane %v1191, %v1212
        %v1215 = vunpack.c.l.s4 1966171168
        %v1216 = vunpack.c.0.s8 %v1215
        %v1217 = vlaneseq
        %v1218 = vshrl.u32 %v1217, 7
        %v1219 = vsub.s32 %v1216, %v1218
        %v1220 = vrot.slane %v1192, %v1219
        %v1221 = vcombine.high %v1199, %v1199
        %v1222 = vcombine.high %v1206, %v1206
        %v1223 = vcombine.high %v1213, %v1213
        %v1224 = vcombine.high %v1220, %v1220
        %v1225 = vcombine.high %v1001, %v1001
        %v1227 = vunpack.c.l.s4 1966171168
        %v1228 = vunpack.c.0.s8 %v1227
        %v1229 = vlaneseq
        %v1230 = vshrl.u32 %v1229, 7
        %v1231 = vsub.s32 %v1228, %v1230
        %v1232 = vrot.slane %v1001, %v1231
        %v1234 = vunpack.c.l.s4 1966171168
        %v1235 = vunpack.c.0.s8 %v1234
        %v1236 = vlaneseq
        %v1237 = vshrl.u32 %v1236, 7
        %v1238 = vsub.s32 %v1235, %v1237
        %v1239 = vrot.slane %v1225, %v1238
        %v1240 = vcombine.high %v1232, %v1232
        %v1241 = vcombine.high %v1239, %v1239
        %v1243 = vunpack.c.l.s4 1966171168
        %v1244 = vunpack.c.0.s8 %v1243
        %v1245 = vlaneseq
        %v1246 = vshrl.u32 %v1245, 7
        %v1247 = vsub.s32 %v1244, %v1246
        %v1248 = vrot.slane %v1232, %v1247
        %v1250 = vunpack.c.l.s4 1966171168
        %v1251 = vunpack.c.0.s8 %v1250
        %v1252 = vlaneseq
        %v1253 = vshrl.u32 %v1252, 7
        %v1254 = vsub.s32 %v1251, %v1253
        %v1255 = vrot.slane %v1239, %v1254
        %v1257 = vunpack.c.l.s4 1966171168
        %v1258 = vunpack.c.0.s8 %v1257
        %v1259 = vlaneseq
        %v1260 = vshrl.u32 %v1259, 7
        %v1261 = vsub.s32 %v1258, %v1260
        %v1262 = vrot.slane %v1240, %v1261
        %v1264 = vunpack.c.l.s4 1966171168
        %v1265 = vunpack.c.0.s8 %v1264
        %v1266 = vlaneseq
        %v1267 = vshrl.u32 %v1266, 7
        %v1268 = vsub.s32 %v1265, %v1267
        %v1269 = vrot.slane %v1241, %v1268
        %v1270 = vcombine.high %v1248, %v1248
        %v1271 = vcombine.high %v1255, %v1255
        %v1272 = vcombine.high %v1262, %v1262
        %v1273 = vcombine.high %v1269, %v1269
        %v1274 = vcombine.high %v1002, %v1002
        %v1276 = vunpack.c.l.s4 1966171168
        %v1277 = vunpack.c.0.s8 %v1276
        %v1278 = vlaneseq
        %v1279 = vshrl.u32 %v1278, 7
        %v1280 = vsub.s32 %v1277, %v1279
        %v1281 = vrot.slane %v1002, %v1280
        %v1283 = vunpack.c.l.s4 1966171168
        %v1284 = vunpack.c.0.s8 %v1283
        %v1285 = vlaneseq
        %v1286 = vshrl.u32 %v1285, 7
        %v1287 = vsub.s32 %v1284, %v1286
        %v1288 = vrot.slane %v1274, %v1287
        %v1289 = vcombine.high %v1281, %v1281
        %v1290 = vcombine.high %v1288, %v1288
        %v1292 = vunpack.c.l.s4 1966171168
        %v1293 = vunpack.c.0.s8 %v1292
        %v1294 = vlaneseq
        %v1295 = vshrl.u32 %v1294, 7
        %v1296 = vsub.s32 %v1293, %v1295
        %v1297 = vrot.slane %v1281, %v1296
        %v1299 = vunpack.c.l.s4 1966171168
        %v1300 = vunpack.c.0.s8 %v1299
        %v1301 = vlaneseq
        %v1302 = vshrl.u32 %v1301, 7
        %v1303 = vsub.s32 %v1300, %v1302
        %v1304 = vrot.slane %v1288, %v1303
        %v1306 = vunpack.c.l.s4 1966171168
        %v1307 = vunpack.c.0.s8 %v1306
        %v1308 = vlaneseq
        %v1309 = vshrl.u32 %v1308, 7
        %v1310 = vsub.s32 %v1307, %v1309
        %v1311 = vrot.slane %v1289, %v1310
        %v1313 = vunpack.c.l.s4 1966171168
        %v1314 = vunpack.c.0.s8 %v1313
        %v1315 = vlaneseq
        %v1316 = vshrl.u32 %v1315, 7
        %v1317 = vsub.s32 %v1314, %v1316
        %v1318 = vrot.slane %v1290, %v1317
        %v1319 = vcombine.high %v1297, %v1297
        %v1320 = vcombine.high %v1304, %v1304
        %v1321 = vcombine.high %v1311, %v1311
        %v1322 = vcombine.high %v1318, %v1318
        %v1323 = vcombine.high %v1003, %v1003
        %v1325 = vunpack.c.l.s4 1966171168
        %v1326 = vunpack.c.0.s8 %v1325
        %v1327 = vlaneseq
        %v1328 = vshrl.u32 %v1327, 7
        %v1329 = vsub.s32 %v1326, %v1328
        %v1330 = vrot.slane %v1003, %v1329
        %v1332 = vunpack.c.l.s4 1966171168
        %v1333 = vunpack.c.0.s8 %v1332
        %v1334 = vlaneseq
        %v1335 = vshrl.u32 %v1334, 7
        %v1336 = vsub.s32 %v1333, %v1335
        %v1337 = vrot.slane %v1323, %v1336
        %v1338 = vcombine.high %v1330, %v1330
        %v1339 = vcombine.high %v1337, %v1337
        %v1341 = vunpack.c.l.s4 1966171168
        %v1342 = vunpack.c.0.s8 %v1341
        %v1343 = vlaneseq
        %v1344 = vshrl.u32 %v1343, 7
        %v1345 = vsub.s32 %v1342, %v1344
        %v1346 = vrot.slane %v1330, %v1345
        %v1348 = vunpack.c.l.s4 1966171168
        %v1349 = vunpack.c.0.s8 %v1348
        %v1350 = vlaneseq
        %v1351 = vshrl.u32 %v1350, 7
        %v1352 = vsub.s32 %v1349, %v1351
        %v1353 = vrot.slane %v1337, %v1352
        %v1355 = vunpack.c.l.s4 1966171168
        %v1356 = vunpack.c.0.s8 %v1355
        %v1357 = vlaneseq
        %v1358 = vshrl.u32 %v1357, 7
        %v1359 = vsub.s32 %v1356, %v1358
        %v1360 = vrot.slane %v1338, %v1359
        %v1362 = vunpack.c.l.s4 1966171168
        %v1363 = vunpack.c.0.s8 %v1362
        %v1364 = vlaneseq
        %v1365 = vshrl.u32 %v1364, 7
        %v1366 = vsub.s32 %v1363, %v1365
        %v1367 = vrot.slane %v1339, %v1366
        %v1368 = vcombine.high %v1346, %v1346
        %v1369 = vcombine.high %v1353, %v1353
        %v1370 = vcombine.high %v1360, %v1360
        %v1371 = vcombine.high %v1367, %v1367
        %v1372 = vcombine.high %v1004, %v1004
        %v1374 = vunpack.c.l.s4 1966171168
        %v1375 = vunpack.c.0.s8 %v1374
        %v1376 = vlaneseq
        %v1377 = vshrl.u32 %v1376, 7
        %v1378 = vsub.s32 %v1375, %v1377
        %v1379 = vrot.slane %v1004, %v1378
        %v1381 = vunpack.c.l.s4 1966171168
        %v1382 = vunpack.c.0.s8 %v1381
        %v1383 = vlaneseq
        %v1384 = vshrl.u32 %v1383, 7
        %v1385 = vsub.s32 %v1382, %v1384
        %v1386 = vrot.slane %v1372, %v1385
        %v1387 = vcombine.high %v1379, %v1379
        %v1388 = vcombine.high %v1386, %v1386
        %v1390 = vunpack.c.l.s4 1966171168
        %v1391 = vunpack.c.0.s8 %v1390
        %v1392 = vlaneseq
        %v1393 = vshrl.u32 %v1392, 7
        %v1394 = vsub.s32 %v1391, %v1393
        %v1395 = vrot.slane %v1379, %v1394
        %v1397 = vunpack.c.l.s4 1966171168
        %v1398 = vunpack.c.0.s8 %v1397
        %v1399 = vlaneseq
        %v1400 = vshrl.u32 %v1399, 7
        %v1401 = vsub.s32 %v1398, %v1400
        %v1402 = vrot.slane %v1386, %v1401
        %v1404 = vunpack.c.l.s4 1966171168
        %v1405 = vunpack.c.0.s8 %v1404
        %v1406 = vlaneseq
        %v1407 = vshrl.u32 %v1406, 7
        %v1408 = vsub.s32 %v1405, %v1407
        %v1409 = vrot.slane %v1387, %v1408
        %v1411 = vunpack.c.l.s4 1966171168
        %v1412 = vunpack.c.0.s8 %v1411
        %v1413 = vlaneseq
        %v1414 = vshrl.u32 %v1413, 7
        %v1415 = vsub.s32 %v1412, %v1414
        %v1416 = vrot.slane %v1388, %v1415
        %v1417 = vcombine.high %v1395, %v1395
        %v1418 = vcombine.high %v1402, %v1402
        %v1419 = vcombine.high %v1409, %v1409
        %v1420 = vcombine.high %v1416, %v1416
        %v1421 = vcombine.high %v1005, %v1005
        %v1423 = vunpack.c.l.s4 1966171168
        %v1424 = vunpack.c.0.s8 %v1423
        %v1425 = vlaneseq
        %v1426 = vshrl.u32 %v1425, 7
        %v1427 = vsub.s32 %v1424, %v1426
        %v1428 = vrot.slane %v1005, %v1427
        %v1430 = vunpack.c.l.s4 1966171168
        %v1431 = vunpack.c.0.s8 %v1430
        %v1432 = vlaneseq
        %v1433 = vshrl.u32 %v1432, 7
        %v1434 = vsub.s32 %v1431, %v1433
        %v1435 = vrot.slane %v1421, %v1434
        %v1436 = vcombine.high %v1428, %v1428
        %v1437 = vcombine.high %v1435, %v1435
        %v1439 = vunpack.c.l.s4 1966171168
        %v1440 = vunpack.c.0.s8 %v1439
        %v1441 = vlaneseq
        %v1442 = vshrl.u32 %v1441, 7
        %v1443 = vsub.s32 %v1440, %v1442
        %v1444 = vrot.slane %v1428, %v1443
        %v1446 = vunpack.c.l.s4 1966171168
        %v1447 = vunpack.c.0.s8 %v1446
        %v1448 = vlaneseq
        %v1449 = vshrl.u32 %v1448, 7
        %v1450 = vsub.s32 %v1447, %v1449
        %v1451 = vrot.slane %v1435, %v1450
        %v1453 = vunpack.c.l.s4 1966171168
        %v1454 = vunpack.c.0.s8 %v1453
        %v1455 = vlaneseq
        %v1456 = vshrl.u32 %v1455, 7
        %v1457 = vsub.s32 %v1454, %v1456
        %v1458 = vrot.slane %v1436, %v1457
        %v1460 = vunpack.c.l.s4 1966171168
        %v1461 = vunpack.c.0.s8 %v1460
        %v1462 = vlaneseq
        %v1463 = vshrl.u32 %v1462, 7
        %v1464 = vsub.s32 %v1461, %v1463
        %v1465 = vrot.slane %v1437, %v1464
        %v1466 = vcombine.high %v1444, %v1444
        %v1467 = vcombine.high %v1451, %v1451
        %v1468 = vcombine.high %v1458, %v1458
        %v1469 = vcombine.high %v1465, %v1465
        %v1470 = vcombine.high %v1006, %v1006
        %v1472 = vunpack.c.l.s4 1966171168
        %v1473 = vunpack.c.0.s8 %v1472
        %v1474 = vlaneseq
        %v1475 = vshrl.u32 %v1474, 7
        %v1476 = vsub.s32 %v1473, %v1475
        %v1477 = vrot.slane %v1006, %v1476
        %v1479 = vunpack.c.l.s4 1966171168
        %v1480 = vunpack.c.0.s8 %v1479
        %v1481 = vlaneseq
        %v1482 = vshrl.u32 %v1481, 7
        %v1483 = vsub.s32 %v1480, %v1482
        %v1484 = vrot.slane %v1470, %v1483
        %v1485 = vcombine.high %v1477, %v1477
        %v1486 = vcombine.high %v1484, %v1484
        %v1488 = vunpack.c.l.s4 1966171168
        %v1489 = vunpack.c.0.s8 %v1488
        %v1490 = vlaneseq
        %v1491 = vshrl.u32 %v1490, 7
        %v1492 = vsub.s32 %v1489, %v1491
        %v1493 = vrot.slane %v1477, %v1492
        %v1495 = vunpack.c.l.s4 1966171168
        %v1496 = vunpack.c.0.s8 %v1495
        %v1497 = vlaneseq
        %v1498 = vshrl.u32 %v1497, 7
        %v1499 = vsub.s32 %v1496, %v1498
        %v1500 = vrot.slane %v1484, %v1499
        %v1502 = vunpack.c.l.s4 1966171168
        %v1503 = vunpack.c.0.s8 %v1502
        %v1504 = vlaneseq
        %v1505 = vshrl.u32 %v1504, 7
        %v1506 = vsub.s32 %v1503, %v1505
        %v1507 = vrot.slane %v1485, %v1506
        %v1509 = vunpack.c.l.s4 1966171168
        %v1510 = vunpack.c.0.s8 %v1509
        %v1511 = vlaneseq
        %v1512 = vshrl.u32 %v1511, 7
        %v1513 = vsub.s32 %v1510, %v1512
        %v1514 = vrot.slane %v1486, %v1513
        %v1515 = vcombine.high %v1493, %v1493
        %v1516 = vcombine.high %v1500, %v1500
        %v1517 = vcombine.high %v1507, %v1507
        %v1518 = vcombine.high %v1514, %v1514
        %v1519 = vcombine.high %v1007, %v1007
        %v1521 = vunpack.c.l.s4 1966171168
        %v1522 = vunpack.c.0.s8 %v1521
        %v1523 = vlaneseq
        %v1524 = vshrl.u32 %v1523, 7
        %v1525 = vsub.s32 %v1522, %v1524
        %v1526 = vrot.slane %v1007, %v1525
        %v1528 = vunpack.c.l.s4 1966171168
        %v1529 = vunpack.c.0.s8 %v1528
        %v1530 = vlaneseq
        %v1531 = vshrl.u32 %v1530, 7
        %v1532 = vsub.s32 %v1529, %v1531
        %v1533 = vrot.slane %v1519, %v1532
        %v1534 = vcombine.high %v1526, %v1526
        %v1535 = vcombine.high %v1533, %v1533
        %v1537 = vunpack.c.l.s4 1966171168
        %v1538 = vunpack.c.0.s8 %v1537
        %v1539 = vlaneseq
        %v1540 = vshrl.u32 %v1539, 7
        %v1541 = vsub.s32 %v1538, %v1540
        %v1542 = vrot.slane %v1526, %v1541
        %v1544 = vunpack.c.l.s4 1966171168
        %v1545 = vunpack.c.0.s8 %v1544
        %v1546 = vlaneseq
        %v1547 = vshrl.u32 %v1546, 7
        %v1548 = vsub.s32 %v1545, %v1547
        %v1549 = vrot.slane %v1533, %v1548
        %v1551 = vunpack.c.l.s4 1966171168
        %v1552 = vunpack.c.0.s8 %v1551
        %v1553 = vlaneseq
        %v1554 = vshrl.u32 %v1553, 7
        %v1555 = vsub.s32 %v1552, %v1554
        %v1556 = vrot.slane %v1534, %v1555
        %v1558 = vunpack.c.l.s4 1966171168
        %v1559 = vunpack.c.0.s8 %v1558
        %v1560 = vlaneseq
        %v1561 = vshrl.u32 %v1560, 7
        %v1562 = vsub.s32 %v1559, %v1561
        %v1563 = vrot.slane %v1535, %v1562
        %v1564 = vcombine.high %v1542, %v1542
        %v1565 = vcombine.high %v1549, %v1549
        %v1566 = vcombine.high %v1556, %v1556
        %v1567 = vcombine.high %v1563, %v1563
        %v1568 = vcombine.high %v1008, %v1008
        %v1570 = vunpack.c.l.s4 1966171168
        %v1571 = vunpack.c.0.s8 %v1570
        %v1572 = vlaneseq
        %v1573 = vshrl.u32 %v1572, 7
        %v1574 = vsub.s32 %v1571, %v1573
        %v1575 = vrot.slane %v1008, %v1574
        %v1577 = vunpack.c.l.s4 1966171168
        %v1578 = vunpack.c.0.s8 %v1577
        %v1579 = vlaneseq
        %v1580 = vshrl.u32 %v1579, 7
        %v1581 = vsub.s32 %v1578, %v1580
        %v1582 = vrot.slane %v1568, %v1581
        %v1583 = vcombine.high %v1575, %v1575
        %v1584 = vcombine.high %v1582, %v1582
        %v1586 = vunpack.c.l.s4 1966171168
        %v1587 = vunpack.c.0.s8 %v1586
        %v1588 = vlaneseq
        %v1589 = vshrl.u32 %v1588, 7
        %v1590 = vsub.s32 %v1587, %v1589
        %v1591 = vrot.slane %v1575, %v1590
        %v1593 = vunpack.c.l.s4 1966171168
        %v1594 = vunpack.c.0.s8 %v1593
        %v1595 = vlaneseq
        %v1596 = vshrl.u32 %v1595, 7
        %v1597 = vsub.s32 %v1594, %v1596
        %v1598 = vrot.slane %v1582, %v1597
        %v1600 = vunpack.c.l.s4 1966171168
        %v1601 = vunpack.c.0.s8 %v1600
        %v1602 = vlaneseq
        %v1603 = vshrl.u32 %v1602, 7
        %v1604 = vsub.s32 %v1601, %v1603
        %v1605 = vrot.slane %v1583, %v1604
        %v1607 = vunpack.c.l.s4 1966171168
        %v1608 = vunpack.c.0.s8 %v1607
        %v1609 = vlaneseq
        %v1610 = vshrl.u32 %v1609, 7
        %v1611 = vsub.s32 %v1608, %v1610
        %v1612 = vrot.slane %v1584, %v1611
        %v1613 = vcombine.high %v1591, %v1591
        %v1614 = vcombine.high %v1598, %v1598
        %v1615 = vcombine.high %v1605, %v1605
        %v1616 = vcombine.high %v1612, %v1612
        %v1617 = vcombine.high %v1009, %v1009
        %v1619 = vunpack.c.l.s4 1966171168
        %v1620 = vunpack.c.0.s8 %v1619
        %v1621 = vlaneseq
        %v1622 = vshrl.u32 %v1621, 7
        %v1623 = vsub.s32 %v1620, %v1622
        %v1624 = vrot.slane %v1009, %v1623
        %v1626 = vunpack.c.l.s4 1966171168
        %v1627 = vunpack.c.0.s8 %v1626
        %v1628 = vlaneseq
        %v1629 = vshrl.u32 %v1628, 7
        %v1630 = vsub.s32 %v1627, %v1629
        %v1631 = vrot.slane %v1617, %v1630
        %v1632 = vcombine.high %v1624, %v1624
        %v1633 = vcombine.high %v1631, %v1631
        %v1635 = vunpack.c.l.s4 1966171168
        %v1636 = vunpack.c.0.s8 %v1635
        %v1637 = vlaneseq
        %v1638 = vshrl.u32 %v1637, 7
        %v1639 = vsub.s32 %v1636, %v1638
        %v1640 = vrot.slane %v1624, %v1639
        %v1642 = vunpack.c.l.s4 1966171168
        %v1643 = vunpack.c.0.s8 %v1642
        %v1644 = vlaneseq
        %v1645 = vshrl.u32 %v1644, 7
        %v1646 = vsub.s32 %v1643, %v1645
        %v1647 = vrot.slane %v1631, %v1646
        %v1649 = vunpack.c.l.s4 1966171168
        %v1650 = vunpack.c.0.s8 %v1649
        %v1651 = vlaneseq
        %v1652 = vshrl.u32 %v1651, 7
        %v1653 = vsub.s32 %v1650, %v1652
        %v1654 = vrot.slane %v1632, %v1653
        %v1656 = vunpack.c.l.s4 1966171168
        %v1657 = vunpack.c.0.s8 %v1656
        %v1658 = vlaneseq
        %v1659 = vshrl.u32 %v1658, 7
        %v1660 = vsub.s32 %v1657, %v1659
        %v1661 = vrot.slane %v1633, %v1660
        %v1662 = vcombine.high %v1640, %v1640
        %v1663 = vcombine.high %v1647, %v1647
        %v1664 = vcombine.high %v1654, %v1654
        %v1665 = vcombine.high %v1661, %v1661
        %v1666 = vcombine.high %v1010, %v1010
        %v1668 = vunpack.c.l.s4 1966171168
        %v1669 = vunpack.c.0.s8 %v1668
        %v1670 = vlaneseq
        %v1671 = vshrl.u32 %v1670, 7
        %v1672 = vsub.s32 %v1669, %v1671
        %v1673 = vrot.slane %v1010, %v1672
        %v1675 = vunpack.c.l.s4 1966171168
        %v1676 = vunpack.c.0.s8 %v1675
        %v1677 = vlaneseq
        %v1678 = vshrl.u32 %v1677, 7
        %v1679 = vsub.s32 %v1676, %v1678
        %v1680 = vrot.slane %v1666, %v1679
        %v1681 = vcombine.high %v1673, %v1673
        %v1682 = vcombine.high %v1680, %v1680
        %v1684 = vunpack.c.l.s4 1966171168
        %v1685 = vunpack.c.0.s8 %v1684
        %v1686 = vlaneseq
        %v1687 = vshrl.u32 %v1686, 7
        %v1688 = vsub.s32 %v1685, %v1687
        %v1689 = vrot.slane %v1673, %v1688
        %v1691 = vunpack.c.l.s4 1966171168
        %v1692 = vunpack.c.0.s8 %v1691
        %v1693 = vlaneseq
        %v1694 = vshrl.u32 %v1693, 7
        %v1695 = vsub.s32 %v1692, %v1694
        %v1696 = vrot.slane %v1680, %v1695
        %v1698 = vunpack.c.l.s4 1966171168
        %v1699 = vunpack.c.0.s8 %v1698
        %v1700 = vlaneseq
        %v1701 = vshrl.u32 %v1700, 7
        %v1702 = vsub.s32 %v1699, %v1701
        %v1703 = vrot.slane %v1681, %v1702
        %v1705 = vunpack.c.l.s4 1966171168
        %v1706 = vunpack.c.0.s8 %v1705
        %v1707 = vlaneseq
        %v1708 = vshrl.u32 %v1707, 7
        %v1709 = vsub.s32 %v1706, %v1708
        %v1710 = vrot.slane %v1682, %v1709
        %v1711 = vcombine.high %v1689, %v1689
        %v1712 = vcombine.high %v1696, %v1696
        %v1713 = vcombine.high %v1703, %v1703
        %v1714 = vcombine.high %v1710, %v1710
        %v1715 = vcombine.high %v1011, %v1011
        %v1717 = vunpack.c.l.s4 1966171168
        %v1718 = vunpack.c.0.s8 %v1717
        %v1719 = vlaneseq
        %v1720 = vshrl.u32 %v1719, 7
        %v1721 = vsub.s32 %v1718, %v1720
        %v1722 = vrot.slane %v1011, %v1721
        %v1724 = vunpack.c.l.s4 1966171168
        %v1725 = vunpack.c.0.s8 %v1724
        %v1726 = vlaneseq
        %v1727 = vshrl.u32 %v1726, 7
        %v1728 = vsub.s32 %v1725, %v1727
        %v1729 = vrot.slane %v1715, %v1728
        %v1730 = vcombine.high %v1722, %v1722
        %v1731 = vcombine.high %v1729, %v1729
        %v1733 = vunpack.c.l.s4 1966171168
        %v1734 = vunpack.c.0.s8 %v1733
        %v1735 = vlaneseq
        %v1736 = vshrl.u32 %v1735, 7
        %v1737 = vsub.s32 %v1734, %v1736
        %v1738 = vrot.slane %v1722, %v1737
        %v1740 = vunpack.c.l.s4 1966171168
        %v1741 = vunpack.c.0.s8 %v1740
        %v1742 = vlaneseq
        %v1743 = vshrl.u32 %v1742, 7
        %v1744 = vsub.s32 %v1741, %v1743
        %v1745 = vrot.slane %v1729, %v1744
        %v1747 = vunpack.c.l.s4 1966171168
        %v1748 = vunpack.c.0.s8 %v1747
        %v1749 = vlaneseq
        %v1750 = vshrl.u32 %v1749, 7
        %v1751 = vsub.s32 %v1748, %v1750
        %v1752 = vrot.slane %v1730, %v1751
        %v1754 = vunpack.c.l.s4 1966171168
        %v1755 = vunpack.c.0.s8 %v1754
        %v1756 = vlaneseq
        %v1757 = vshrl.u32 %v1756, 7
        %v1758 = vsub.s32 %v1755, %v1757
        %v1759 = vrot.slane %v1731, %v1758
        %v1760 = vcombine.high %v1738, %v1738
        %v1761 = vcombine.high %v1745, %v1745
        %v1762 = vcombine.high %v1752, %v1752
        %v1763 = vcombine.high %v1759, %v1759
        %v1764 = vcombine.high %v1012, %v1012
        %v1766 = vunpack.c.l.s4 1966171168
        %v1767 = vunpack.c.0.s8 %v1766
        %v1768 = vlaneseq
        %v1769 = vshrl.u32 %v1768, 7
        %v1770 = vsub.s32 %v1767, %v1769
        %v1771 = vrot.slane %v1012, %v1770
        %v1773 = vunpack.c.l.s4 1966171168
        %v1774 = vunpack.c.0.s8 %v1773
        %v1775 = vlaneseq
        %v1776 = vshrl.u32 %v1775, 7
        %v1777 = vsub.s32 %v1774, %v1776
        %v1778 = vrot.slane %v1764, %v1777
        %v1779 = vcombine.high %v1771, %v1771
        %v1780 = vcombine.high %v1778, %v1778
        %v1782 = vunpack.c.l.s4 1966171168
        %v1783 = vunpack.c.0.s8 %v1782
        %v1784 = vlaneseq
        %v1785 = vshrl.u32 %v1784, 7
        %v1786 = vsub.s32 %v1783, %v1785
        %v1787 = vrot.slane %v1771, %v1786
        %v1789 = vunpack.c.l.s4 1966171168
        %v1790 = vunpack.c.0.s8 %v1789
        %v1791 = vlaneseq
        %v1792 = vshrl.u32 %v1791, 7
        %v1793 = vsub.s32 %v1790, %v1792
        %v1794 = vrot.slane %v1778, %v1793
        %v1796 = vunpack.c.l.s4 1966171168
        %v1797 = vunpack.c.0.s8 %v1796
        %v1798 = vlaneseq
        %v1799 = vshrl.u32 %v1798, 7
        %v1800 = vsub.s32 %v1797, %v1799
        %v1801 = vrot.slane %v1779, %v1800
        %v1803 = vunpack.c.l.s4 1966171168
        %v1804 = vunpack.c.0.s8 %v1803
        %v1805 = vlaneseq
        %v1806 = vshrl.u32 %v1805, 7
        %v1807 = vsub.s32 %v1804, %v1806
        %v1808 = vrot.slane %v1780, %v1807
        %v1809 = vcombine.high %v1787, %v1787
        %v1810 = vcombine.high %v1794, %v1794
        %v1811 = vcombine.high %v1801, %v1801
        %v1812 = vcombine.high %v1808, %v1808
        %v1813 = vcombine.low %v1052, %v1066
        %v1814 = vcombine.low %v1074, %v1076
        %v1815 = vcombine.low %v1059, %v1073
        %v1816 = vcombine.low %v1075, %v1077
        %v1818 = vunpack.c.l.s4 1966171168
        %v1819 = vunpack.c.0.s8 %v1818
        %v1820 = vlaneseq
        %v1821 = vshrl.u32 %v1820, 7
        %v1822 = vsub.s32 %v1819, %v1821
        %v1823 = vrot.slane %v1813, %v1822
        %v1825 = vunpack.c.l.s4 1966171168
        %v1826 = vunpack.c.0.s8 %v1825
        %v1827 = vlaneseq
        %v1828 = vshrl.u32 %v1827, 7
        %v1829 = vsub.s32 %v1826, %v1828
        %v1830 = vrot.slane %v1814, %v1829
        %v1832 = vunpack.c.l.s4 1966171168
        %v1833 = vunpack.c.0.s8 %v1832
        %v1834 = vlaneseq
        %v1835 = vshrl.u32 %v1834, 7
        %v1836 = vsub.s32 %v1833, %v1835
        %v1837 = vrot.slane %v1815, %v1836
        %v1839 = vunpack.c.l.s4 1966171168
        %v1840 = vunpack.c.0.s8 %v1839
        %v1841 = vlaneseq
        %v1842 = vshrl.u32 %v1841, 7
        %v1843 = vsub.s32 %v1840, %v1842
        %v1844 = vrot.slane %v1816, %v1843
        %v1845 = vcombine.low %v1823, %v1830
        %v1846 = vcombine.low %v1837, %v1844
        %v1848 = vunpack.c.l.s4 1966171168
        %v1849 = vunpack.c.0.s8 %v1848
        %v1850 = vlaneseq
        %v1851 = vshrl.u32 %v1850, 7
        %v1852 = vsub.s32 %v1849, %v1851
        %v1853 = vrot.slane %v1845, %v1852
        %v1855 = vunpack.c.l.s4 1966171168
        %v1856 = vunpack.c.0.s8 %v1855
        %v1857 = vlaneseq
        %v1858 = vshrl.u32 %v1857, 7
        %v1859 = vsub.s32 %v1856, %v1858
        %v1860 = vrot.slane %v1846, %v1859
        %v1861 = vcombine.low %v1853, %v1860
        %v1862 = vcombine.low %v1101, %v1115
        %v1863 = vcombine.low %v1123, %v1125
        %v1864 = vcombine.low %v1108, %v1122
        %v1865 = vcombine.low %v1124, %v1126
        %v1867 = vunpack.c.l.s4 1966171168
        %v1868 = vunpack.c.0.s8 %v1867
        %v1869 = vlaneseq
        %v1870 = vshrl.u32 %v1869, 7
        %v1871 = vsub.s32 %v1868, %v1870
        %v1872 = vrot.slane %v1862, %v1871
        %v1874 = vunpack.c.l.s4 1966171168
        %v1875 = vunpack.c.0.s8 %v1874
        %v1876 = vlaneseq
        %v1877 = vshrl.u32 %v1876, 7
        %v1878 = vsub.s32 %v1875, %v1877
        %v1879 = vrot.slane %v1863, %v1878
        %v1881 = vunpack.c.l.s4 1966171168
        %v1882 = vunpack.c.0.s8 %v1881
        %v1883 = vlaneseq
        %v1884 = vshrl.u32 %v1883, 7
        %v1885 = vsub.s32 %v1882, %v1884
        %v1886 = vrot.slane %v1864, %v1885
        %v1888 = vunpack.c.l.s4 1966171168
        %v1889 = vunpack.c.0.s8 %v1888
        %v1890 = vlaneseq
        %v1891 = vshrl.u32 %v1890, 7
        %v1892 = vsub.s32 %v1889, %v1891
        %v1893 = vrot.slane %v1865, %v1892
        %v1894 = vcombine.low %v1872, %v1879
        %v1895 = vcombine.low %v1886, %v1893
        %v1897 = vunpack.c.l.s4 1966171168
        %v1898 = vunpack.c.0.s8 %v1897
        %v1899 = vlaneseq
        %v1900 = vshrl.u32 %v1899, 7
        %v1901 = vsub.s32 %v1898, %v1900
        %v1902 = vrot.slane %v1894, %v1901
        %v1904 = vunpack.c.l.s4 1966171168
        %v1905 = vunpack.c.0.s8 %v1904
        %v1906 = vlaneseq
        %v1907 = vshrl.u32 %v1906, 7
        %v1908 = vsub.s32 %v1905, %v1907
        %v1909 = vrot.slane %v1895, %v1908
        %v1910 = vcombine.low %v1902, %v1909
        %v1911 = vcombine.low %v1150, %v1164
        %v1912 = vcombine.low %v1172, %v1174
        %v1913 = vcombine.low %v1157, %v1171
        %v1914 = vcombine.low %v1173, %v1175
        %v1916 = vunpack.c.l.s4 1966171168
        %v1917 = vunpack.c.0.s8 %v1916
        %v1918 = vlaneseq
        %v1919 = vshrl.u32 %v1918, 7
        %v1920 = vsub.s32 %v1917, %v1919
        %v1921 = vrot.slane %v1911, %v1920
        %v1923 = vunpack.c.l.s4 1966171168
        %v1924 = vunpack.c.0.s8 %v1923
        %v1925 = vlaneseq
        %v1926 = vshrl.u32 %v1925, 7
        %v1927 = vsub.s32 %v1924, %v1926
        %v1928 = vrot.slane %v1912, %v1927
        %v1930 = vunpack.c.l.s4 1966171168
        %v1931 = vunpack.c.0.s8 %v1930
        %v1932 = vlaneseq
        %v1933 = vshrl.u32 %v1932, 7
        %v1934 = vsub.s32 %v1931, %v1933
        %v1935 = vrot.slane %v1913, %v1934
        %v1937 = vunpack.c.l.s4 1966171168
        %v1938 = vunpack.c.0.s8 %v1937
        %v1939 = vlaneseq
        %v1940 = vshrl.u32 %v1939, 7
        %v1941 = vsub.s32 %v1938, %v1940
        %v1942 = vrot.slane %v1914, %v1941
        %v1943 = vcombine.low %v1921, %v1928
        %v1944 = vcombine.low %v1935, %v1942
        %v1946 = vunpack.c.l.s4 1966171168
        %v1947 = vunpack.c.0.s8 %v1946
        %v1948 = vlaneseq
        %v1949 = vshrl.u32 %v1948, 7
        %v1950 = vsub.s32 %v1947, %v1949
        %v1951 = vrot.slane %v1943, %v1950
        %v1953 = vunpack.c.l.s4 1966171168
        %v1954 = vunpack.c.0.s8 %v1953
        %v1955 = vlaneseq
        %v1956 = vshrl.u32 %v1955, 7
        %v1957 = vsub.s32 %v1954, %v1956
        %v1958 = vrot.slane %v1944, %v1957
        %v1959 = vcombine.low %v1951, %v1958
        %v1960 = vcombine.low %v1199, %v1213
        %v1961 = vcombine.low %v1221, %v1223
        %v1962 = vcombine.low %v1206, %v1220
        %v1963 = vcombine.low %v1222, %v1224
        %v1965 = vunpack.c.l.s4 1966171168
        %v1966 = vunpack.c.0.s8 %v1965
        %v1967 = vlaneseq
        %v1968 = vshrl.u32 %v1967, 7
        %v1969 = vsub.s32 %v1966, %v1968
        %v1970 = vrot.slane %v1960, %v1969
        %v1972 = vunpack.c.l.s4 1966171168
        %v1973 = vunpack.c.0.s8 %v1972
        %v1974 = vlaneseq
        %v1975 = vshrl.u32 %v1974, 7
        %v1976 = vsub.s32 %v1973, %v1975
        %v1977 = vrot.slane %v1961, %v1976
        %v1979 = vunpack.c.l.s4 1966171168
        %v1980 = vunpack.c.0.s8 %v1979
        %v1981 = vlaneseq
        %v1982 = vshrl.u32 %v1981, 7
        %v1983 = vsub.s32 %v1980, %v1982
        %v1984 = vrot.slane %v1962, %v1983
        %v1986 = vunpack.c.l.s4 1966171168
        %v1987 = vunpack.c.0.s8 %v1986
        %v1988 = vlaneseq
        %v1989 = vshrl.u32 %v1988, 7
        %v1990 = vsub.s32 %v1987, %v1989
        %v1991 = vrot.slane %v1963, %v1990
        %v1992 = vcombine.low %v1970, %v1977
        %v1993 = vcombine.low %v1984, %v1991
        %v1995 = vunpack.c.l.s4 1966171168
        %v1996 = vunpack.c.0.s8 %v1995
        %v1997 = vlaneseq
        %v1998 = vshrl.u32 %v1997, 7
        %v1999 = vsub.s32 %v1996, %v1998
        %v2000 = vrot.slane %v1992, %v1999
        %v2002 = vunpack.c.l.s4 1966171168
        %v2003 = vunpack.c.0.s8 %v2002
        %v2004 = vlaneseq
        %v2005 = vshrl.u32 %v2004, 7
        %v2006 = vsub.s32 %v2003, %v2005
        %v2007 = vrot.slane %v1993, %v2006
        %v2008 = vcombine.low %v2000, %v2007
        %v2009 = vcombine.low %v1248, %v1262
        %v2010 = vcombine.low %v1270, %v1272
        %v2011 = vcombine.low %v1255, %v1269
        %v2012 = vcombine.low %v1271, %v1273
        %v2014 = vunpack.c.l.s4 1966171168
        %v2015 = vunpack.c.0.s8 %v2014
        %v2016 = vlaneseq
        %v2017 = vshrl.u32 %v2016, 7
        %v2018 = vsub.s32 %v2015, %v2017
        %v2019 = vrot.slane %v2009, %v2018
        %v2021 = vunpack.c.l.s4 1966171168
        %v2022 = vunpack.c.0.s8 %v2021
        %v2023 = vlaneseq
        %v2024 = vshrl.u32 %v2023, 7
        %v2025 = vsub.s32 %v2022, %v2024
        %v2026 = vrot.slane %v2010, %v2025
        %v2028 = vunpack.c.l.s4 1966171168
        %v2029 = vunpack.c.0.s8 %v2028
        %v2030 = vlaneseq
        %v2031 = vshrl.u32 %v2030, 7
        %v2032 = vsub.s32 %v2029, %v2031
        %v2033 = vrot.slane %v2011, %v2032
        %v2035 = vunpack.c.l.s4 1966171168
        %v2036 = vunpack.c.0.s8 %v2035
        %v2037 = vlaneseq
        %v2038 = vshrl.u32 %v2037, 7
        %v2039 = vsub.s32 %v2036, %v2038
        %v2040 = vrot.slane %v2012, %v2039
        %v2041 = vcombine.low %v2019, %v2026
        %v2042 = vcombine.low %v2033, %v2040
        %v2044 = vunpack.c.l.s4 1966171168
        %v2045 = vunpack.c.0.s8 %v2044
        %v2046 = vlaneseq
        %v2047 = vshrl.u32 %v2046, 7
        %v2048 = vsub.s32 %v2045, %v2047
        %v2049 = vrot.slane %v2041, %v2048
        %v2051 = vunpack.c.l.s4 1966171168
        %v2052 = vunpack.c.0.s8 %v2051
        %v2053 = vlaneseq
        %v2054 = vshrl.u32 %v2053, 7
        %v2055 = vsub.s32 %v2052, %v2054
        %v2056 = vrot.slane %v2042, %v2055
        %v2057 = vcombine.low %v2049, %v2056
        %v2058 = vcombine.low %v1297, %v1311
        %v2059 = vcombine.low %v1319, %v1321
        %v2060 = vcombine.low %v1304, %v1318
        %v2061 = vcombine.low %v1320, %v1322
        %v2063 = vunpack.c.l.s4 1966171168
        %v2064 = vunpack.c.0.s8 %v2063
        %v2065 = vlaneseq
        %v2066 = vshrl.u32 %v2065, 7
        %v2067 = vsub.s32 %v2064, %v2066
        %v2068 = vrot.slane %v2058, %v2067
        %v2070 = vunpack.c.l.s4 1966171168
        %v2071 = vunpack.c.0.s8 %v2070
        %v2072 = vlaneseq
        %v2073 = vshrl.u32 %v2072, 7
        %v2074 = vsub.s32 %v2071, %v2073
        %v2075 = vrot.slane %v2059, %v2074
        %v2077 = vunpack.c.l.s4 1966171168
        %v2078 = vunpack.c.0.s8 %v2077
        %v2079 = vlaneseq
        %v2080 = vshrl.u32 %v2079, 7
        %v2081 = vsub.s32 %v2078, %v2080
        %v2082 = vrot.slane %v2060, %v2081
        %v2084 = vunpack.c.l.s4 1966171168
        %v2085 = vunpack.c.0.s8 %v2084
        %v2086 = vlaneseq
        %v2087 = vshrl.u32 %v2086, 7
        %v2088 = vsub.s32 %v2085, %v2087
        %v2089 = vrot.slane %v2061, %v2088
        %v2090 = vcombine.low %v2068, %v2075
        %v2091 = vcombine.low %v2082, %v2089
        %v2093 = vunpack.c.l.s4 1966171168
        %v2094 = vunpack.c.0.s8 %v2093
        %v2095 = vlaneseq
        %v2096 = vshrl.u32 %v2095, 7
        %v2097 = vsub.s32 %v2094, %v2096
        %v2098 = vrot.slane %v2090, %v2097
        %v2100 = vunpack.c.l.s4 1966171168
        %v2101 = vunpack.c.0.s8 %v2100
        %v2102 = vlaneseq
        %v2103 = vshrl.u32 %v2102, 7
        %v2104 = vsub.s32 %v2101, %v2103
        %v2105 = vrot.slane %v2091, %v2104
        %v2106 = vcombine.low %v2098, %v2105
        %v2107 = vcombine.low %v1346, %v1360
        %v2108 = vcombine.low %v1368, %v1370
        %v2109 = vcombine.low %v1353, %v1367
        %v2110 = vcombine.low %v1369, %v1371
        %v2112 = vunpack.c.l.s4 1966171168
        %v2113 = vunpack.c.0.s8 %v2112
        %v2114 = vlaneseq
        %v2115 = vshrl.u32 %v2114, 7
        %v2116 = vsub.s32 %v2113, %v2115
        %v2117 = vrot.slane %v2107, %v2116
        %v2119 = vunpack.c.l.s4 1966171168
        %v2120 = vunpack.c.0.s8 %v2119
        %v2121 = vlaneseq
        %v2122 = vshrl.u32 %v2121, 7
        %v2123 = vsub.s32 %v2120, %v2122
        %v2124 = vrot.slane %v2108, %v2123
        %v2126 = vunpack.c.l.s4 1966171168
        %v2127 = vunpack.c.0.s8 %v2126
        %v2128 = vlaneseq
        %v2129 = vshrl.u32 %v2128, 7
        %v2130 = vsub.s32 %v2127, %v2129
        %v2131 = vrot.slane %v2109, %v2130
        %v2133 = vunpack.c.l.s4 1966171168
        %v2134 = vunpack.c.0.s8 %v2133
        %v2135 = vlaneseq
        %v2136 = vshrl.u32 %v2135, 7
        %v2137 = vsub.s32 %v2134, %v2136
        %v2138 = vrot.slane %v2110, %v2137
        %v2139 = vcombine.low %v2117, %v2124
        %v2140 = vcombine.low %v2131, %v2138
        %v2142 = vunpack.c.l.s4 1966171168
        %v2143 = vunpack.c.0.s8 %v2142
        %v2144 = vlaneseq
        %v2145 = vshrl.u32 %v2144, 7
        %v2146 = vsub.s32 %v2143, %v2145
        %v2147 = vrot.slane %v2139, %v2146
        %v2149 = vunpack.c.l.s4 1966171168
        %v2150 = vunpack.c.0.s8 %v2149
        %v2151 = vlaneseq
        %v2152 = vshrl.u32 %v2151, 7
        %v2153 = vsub.s32 %v2150, %v2152
        %v2154 = vrot.slane %v2140, %v2153
        %v2155 = vcombine.low %v2147, %v2154
        %v2156 = vcombine.low %v1395, %v1409
        %v2157 = vcombine.low %v1417, %v1419
        %v2158 = vcombine.low %v1402, %v1416
        %v2159 = vcombine.low %v1418, %v1420
        %v2161 = vunpack.c.l.s4 1966171168
        %v2162 = vunpack.c.0.s8 %v2161
        %v2163 = vlaneseq
        %v2164 = vshrl.u32 %v2163, 7
        %v2165 = vsub.s32 %v2162, %v2164
        %v2166 = vrot.slane %v2156, %v2165
        %v2168 = vunpack.c.l.s4 1966171168
        %v2169 = vunpack.c.0.s8 %v2168
        %v2170 = vlaneseq
        %v2171 = vshrl.u32 %v2170, 7
        %v2172 = vsub.s32 %v2169, %v2171
        %v2173 = vrot.slane %v2157, %v2172
        %v2175 = vunpack.c.l.s4 1966171168
        %v2176 = vunpack.c.0.s8 %v2175
        %v2177 = vlaneseq
        %v2178 = vshrl.u32 %v2177, 7
        %v2179 = vsub.s32 %v2176, %v2178
        %v2180 = vrot.slane %v2158, %v2179
        %v2182 = vunpack.c.l.s4 1966171168
        %v2183 = vunpack.c.0.s8 %v2182
        %v2184 = vlaneseq
        %v2185 = vshrl.u32 %v2184, 7
        %v2186 = vsub.s32 %v2183, %v2185
        %v2187 = vrot.slane %v2159, %v2186
        %v2188 = vcombine.low %v2166, %v2173
        %v2189 = vcombine.low %v2180, %v2187
        %v2191 = vunpack.c.l.s4 1966171168
        %v2192 = vunpack.c.0.s8 %v2191
        %v2193 = vlaneseq
        %v2194 = vshrl.u32 %v2193, 7
        %v2195 = vsub.s32 %v2192, %v2194
        %v2196 = vrot.slane %v2188, %v2195
        %v2198 = vunpack.c.l.s4 1966171168
        %v2199 = vunpack.c.0.s8 %v2198
        %v2200 = vlaneseq
        %v2201 = vshrl.u32 %v2200, 7
        %v2202 = vsub.s32 %v2199, %v2201
        %v2203 = vrot.slane %v2189, %v2202
        %v2204 = vcombine.low %v2196, %v2203
        %v2205 = vcombine.low %v1444, %v1458
        %v2206 = vcombine.low %v1466, %v1468
        %v2207 = vcombine.low %v1451, %v1465
        %v2208 = vcombine.low %v1467, %v1469
        %v2210 = vunpack.c.l.s4 1966171168
        %v2211 = vunpack.c.0.s8 %v2210
        %v2212 = vlaneseq
        %v2213 = vshrl.u32 %v2212, 7
        %v2214 = vsub.s32 %v2211, %v2213
        %v2215 = vrot.slane %v2205, %v2214
        %v2217 = vunpack.c.l.s4 1966171168
        %v2218 = vunpack.c.0.s8 %v2217
        %v2219 = vlaneseq
        %v2220 = vshrl.u32 %v2219, 7
        %v2221 = vsub.s32 %v2218, %v2220
        %v2222 = vrot.slane %v2206, %v2221
        %v2224 = vunpack.c.l.s4 1966171168
        %v2225 = vunpack.c.0.s8 %v2224
        %v2226 = vlaneseq
        %v2227 = vshrl.u32 %v2226, 7
        %v2228 = vsub.s32 %v2225, %v2227
        %v2229 = vrot.slane %v2207, %v2228
        %v2231 = vunpack.c.l.s4 1966171168
        %v2232 = vunpack.c.0.s8 %v2231
        %v2233 = vlaneseq
        %v2234 = vshrl.u32 %v2233, 7
        %v2235 = vsub.s32 %v2232, %v2234
        %v2236 = vrot.slane %v2208, %v2235
        %v2237 = vcombine.low %v2215, %v2222
        %v2238 = vcombine.low %v2229, %v2236
        %v2240 = vunpack.c.l.s4 1966171168
        %v2241 = vunpack.c.0.s8 %v2240
        %v2242 = vlaneseq
        %v2243 = vshrl.u32 %v2242, 7
        %v2244 = vsub.s32 %v2241, %v2243
        %v2245 = vrot.slane %v2237, %v2244
        %v2247 = vunpack.c.l.s4 1966171168
        %v2248 = vunpack.c.0.s8 %v2247
        %v2249 = vlaneseq
        %v2250 = vshrl.u32 %v2249, 7
        %v2251 = vsub.s32 %v2248, %v2250
        %v2252 = vrot.slane %v2238, %v2251
        %v2253 = vcombine.low %v2245, %v2252
        %v2254 = vcombine.low %v1493, %v1507
        %v2255 = vcombine.low %v1515, %v1517
        %v2256 = vcombine.low %v1500, %v1514
        %v2257 = vcombine.low %v1516, %v1518
        %v2259 = vunpack.c.l.s4 1966171168
        %v2260 = vunpack.c.0.s8 %v2259
        %v2261 = vlaneseq
        %v2262 = vshrl.u32 %v2261, 7
        %v2263 = vsub.s32 %v2260, %v2262
        %v2264 = vrot.slane %v2254, %v2263
        %v2266 = vunpack.c.l.s4 1966171168
        %v2267 = vunpack.c.0.s8 %v2266
        %v2268 = vlaneseq
        %v2269 = vshrl.u32 %v2268, 7
        %v2270 = vsub.s32 %v2267, %v2269
        %v2271 = vrot.slane %v2255, %v2270
        %v2273 = vunpack.c.l.s4 1966171168
        %v2274 = vunpack.c.0.s8 %v2273
        %v2275 = vlaneseq
        %v2276 = vshrl.u32 %v2275, 7
        %v2277 = vsub.s32 %v2274, %v2276
        %v2278 = vrot.slane %v2256, %v2277
        %v2280 = vunpack.c.l.s4 1966171168
        %v2281 = vunpack.c.0.s8 %v2280
        %v2282 = vlaneseq
        %v2283 = vshrl.u32 %v2282, 7
        %v2284 = vsub.s32 %v2281, %v2283
        %v2285 = vrot.slane %v2257, %v2284
        %v2286 = vcombine.low %v2264, %v2271
        %v2287 = vcombine.low %v2278, %v2285
        %v2289 = vunpack.c.l.s4 1966171168
        %v2290 = vunpack.c.0.s8 %v2289
        %v2291 = vlaneseq
        %v2292 = vshrl.u32 %v2291, 7
        %v2293 = vsub.s32 %v2290, %v2292
        %v2294 = vrot.slane %v2286, %v2293
        %v2296 = vunpack.c.l.s4 1966171168
        %v2297 = vunpack.c.0.s8 %v2296
        %v2298 = vlaneseq
        %v2299 = vshrl.u32 %v2298, 7
        %v2300 = vsub.s32 %v2297, %v2299
        %v2301 = vrot.slane %v2287, %v2300
        %v2302 = vcombine.low %v2294, %v2301
        %v2303 = vcombine.low %v1542, %v1556
        %v2304 = vcombine.low %v1564, %v1566
        %v2305 = vcombine.low %v1549, %v1563
        %v2306 = vcombine.low %v1565, %v1567
        %v2308 = vunpack.c.l.s4 1966171168
        %v2309 = vunpack.c.0.s8 %v2308
        %v2310 = vlaneseq
        %v2311 = vshrl.u32 %v2310, 7
        %v2312 = vsub.s32 %v2309, %v2311
        %v2313 = vrot.slane %v2303, %v2312
        %v2315 = vunpack.c.l.s4 1966171168
        %v2316 = vunpack.c.0.s8 %v2315
        %v2317 = vlaneseq
        %v2318 = vshrl.u32 %v2317, 7
        %v2319 = vsub.s32 %v2316, %v2318
        %v2320 = vrot.slane %v2304, %v2319
        %v2322 = vunpack.c.l.s4 1966171168
        %v2323 = vunpack.c.0.s8 %v2322
        %v2324 = vlaneseq
        %v2325 = vshrl.u32 %v2324, 7
        %v2326 = vsub.s32 %v2323, %v2325
        %v2327 = vrot.slane %v2305, %v2326
        %v2329 = vunpack.c.l.s4 1966171168
        %v2330 = vunpack.c.0.s8 %v2329
        %v2331 = vlaneseq
        %v2332 = vshrl.u32 %v2331, 7
        %v2333 = vsub.s32 %v2330, %v2332
        %v2334 = vrot.slane %v2306, %v2333
        %v2335 = vcombine.low %v2313, %v2320
        %v2336 = vcombine.low %v2327, %v2334
        %v2338 = vunpack.c.l.s4 1966171168
        %v2339 = vunpack.c.0.s8 %v2338
        %v2340 = vlaneseq
        %v2341 = vshrl.u32 %v2340, 7
        %v2342 = vsub.s32 %v2339, %v2341
        %v2343 = vrot.slane %v2335, %v2342
        %v2345 = vunpack.c.l.s4 1966171168
        %v2346 = vunpack.c.0.s8 %v2345
        %v2347 = vlaneseq
        %v2348 = vshrl.u32 %v2347, 7
        %v2349 = vsub.s32 %v2346, %v2348
        %v2350 = vrot.slane %v2336, %v2349
        %v2351 = vcombine.low %v2343, %v2350
        %v2352 = vcombine.low %v1591, %v1605
        %v2353 = vcombine.low %v1613, %v1615
        %v2354 = vcombine.low %v1598, %v1612
        %v2355 = vcombine.low %v1614, %v1616
        %v2357 = vunpack.c.l.s4 1966171168
        %v2358 = vunpack.c.0.s8 %v2357
        %v2359 = vlaneseq
        %v2360 = vshrl.u32 %v2359, 7
        %v2361 = vsub.s32 %v2358, %v2360
        %v2362 = vrot.slane %v2352, %v2361
        %v2364 = vunpack.c.l.s4 1966171168
        %v2365 = vunpack.c.0.s8 %v2364
        %v2366 = vlaneseq
        %v2367 = vshrl.u32 %v2366, 7
        %v2368 = vsub.s32 %v2365, %v2367
        %v2369 = vrot.slane %v2353, %v2368
        %v2371 = vunpack.c.l.s4 1966171168
        %v2372 = vunpack.c.0.s8 %v2371
        %v2373 = vlaneseq
        %v2374 = vshrl.u32 %v2373, 7
        %v2375 = vsub.s32 %v2372, %v2374
        %v2376 = vrot.slane %v2354, %v2375
        %v2378 = vunpack.c.l.s4 1966171168
        %v2379 = vunpack.c.0.s8 %v2378
        %v2380 = vlaneseq
        %v2381 = vshrl.u32 %v2380, 7
        %v2382 = vsub.s32 %v2379, %v2381
        %v2383 = vrot.slane %v2355, %v2382
        %v2384 = vcombine.low %v2362, %v2369
        %v2385 = vcombine.low %v2376, %v2383
        %v2387 = vunpack.c.l.s4 1966171168
        %v2388 = vunpack.c.0.s8 %v2387
        %v2389 = vlaneseq
        %v2390 = vshrl.u32 %v2389, 7
        %v2391 = vsub.s32 %v2388, %v2390
        %v2392 = vrot.slane %v2384, %v2391
        %v2394 = vunpack.c.l.s4 1966171168
        %v2395 = vunpack.c.0.s8 %v2394
        %v2396 = vlaneseq
        %v2397 = vshrl.u32 %v2396, 7
        %v2398 = vsub.s32 %v2395, %v2397
        %v2399 = vrot.slane %v2385, %v2398
        %v2400 = vcombine.low %v2392, %v2399
        %v2401 = vcombine.low %v1640, %v1654
        %v2402 = vcombine.low %v1662, %v1664
        %v2403 = vcombine.low %v1647, %v1661
        %v2404 = vcombine.low %v1663, %v1665
        %v2406 = vunpack.c.l.s4 1966171168
        %v2407 = vunpack.c.0.s8 %v2406
        %v2408 = vlaneseq
        %v2409 = vshrl.u32 %v2408, 7
        %v2410 = vsub.s32 %v2407, %v2409
        %v2411 = vrot.slane %v2401, %v2410
        %v2413 = vunpack.c.l.s4 1966171168
        %v2414 = vunpack.c.0.s8 %v2413
        %v2415 = vlaneseq
        %v2416 = vshrl.u32 %v2415, 7
        %v2417 = vsub.s32 %v2414, %v2416
        %v2418 = vrot.slane %v2402, %v2417
        %v2420 = vunpack.c.l.s4 1966171168
        %v2421 = vunpack.c.0.s8 %v2420
        %v2422 = vlaneseq
        %v2423 = vshrl.u32 %v2422, 7
        %v2424 = vsub.s32 %v2421, %v2423
        %v2425 = vrot.slane %v2403, %v2424
        %v2427 = vunpack.c.l.s4 1966171168
        %v2428 = vunpack.c.0.s8 %v2427
        %v2429 = vlaneseq
        %v2430 = vshrl.u32 %v2429, 7
        %v2431 = vsub.s32 %v2428, %v2430
        %v2432 = vrot.slane %v2404, %v2431
        %v2433 = vcombine.low %v2411, %v2418
        %v2434 = vcombine.low %v2425, %v2432
        %v2436 = vunpack.c.l.s4 1966171168
        %v2437 = vunpack.c.0.s8 %v2436
        %v2438 = vlaneseq
        %v2439 = vshrl.u32 %v2438, 7
        %v2440 = vsub.s32 %v2437, %v2439
        %v2441 = vrot.slane %v2433, %v2440
        %v2443 = vunpack.c.l.s4 1966171168
        %v2444 = vunpack.c.0.s8 %v2443
        %v2445 = vlaneseq
        %v2446 = vshrl.u32 %v2445, 7
        %v2447 = vsub.s32 %v2444, %v2446
        %v2448 = vrot.slane %v2434, %v2447
        %v2449 = vcombine.low %v2441, %v2448
        %v2450 = vcombine.low %v1689, %v1703
        %v2451 = vcombine.low %v1711, %v1713
        %v2452 = vcombine.low %v1696, %v1710
        %v2453 = vcombine.low %v1712, %v1714
        %v2455 = vunpack.c.l.s4 1966171168
        %v2456 = vunpack.c.0.s8 %v2455
        %v2457 = vlaneseq
        %v2458 = vshrl.u32 %v2457, 7
        %v2459 = vsub.s32 %v2456, %v2458
        %v2460 = vrot.slane %v2450, %v2459
        %v2462 = vunpack.c.l.s4 1966171168
        %v2463 = vunpack.c.0.s8 %v2462
        %v2464 = vlaneseq
        %v2465 = vshrl.u32 %v2464, 7
        %v2466 = vsub.s32 %v2463, %v2465
        %v2467 = vrot.slane %v2451, %v2466
        %v2469 = vunpack.c.l.s4 1966171168
        %v2470 = vunpack.c.0.s8 %v2469
        %v2471 = vlaneseq
        %v2472 = vshrl.u32 %v2471, 7
        %v2473 = vsub.s32 %v2470, %v2472
        %v2474 = vrot.slane %v2452, %v2473
        %v2476 = vunpack.c.l.s4 1966171168
        %v2477 = vunpack.c.0.s8 %v2476
        %v2478 = vlaneseq
        %v2479 = vshrl.u32 %v2478, 7
        %v2480 = vsub.s32 %v2477, %v2479
        %v2481 = vrot.slane %v2453, %v2480
        %v2482 = vcombine.low %v2460, %v2467
        %v2483 = vcombine.low %v2474, %v2481
        %v2485 = vunpack.c.l.s4 1966171168
        %v2486 = vunpack.c.0.s8 %v2485
        %v2487 = vlaneseq
        %v2488 = vshrl.u32 %v2487, 7
        %v2489 = vsub.s32 %v2486, %v2488
        %v2490 = vrot.slane %v2482, %v2489
        %v2492 = vunpack.c.l.s4 1966171168
        %v2493 = vunpack.c.0.s8 %v2492
        %v2494 = vlaneseq
        %v2495 = vshrl.u32 %v2494, 7
        %v2496 = vsub.s32 %v2493, %v2495
        %v2497 = vrot.slane %v2483, %v2496
        %v2498 = vcombine.low %v2490, %v2497
        %v2499 = vcombine.low %v1738, %v1752
        %v2500 = vcombine.low %v1760, %v1762
        %v2501 = vcombine.low %v1745, %v1759
        %v2502 = vcombine.low %v1761, %v1763
        %v2504 = vunpack.c.l.s4 1966171168
        %v2505 = vunpack.c.0.s8 %v2504
        %v2506 = vlaneseq
        %v2507 = vshrl.u32 %v2506, 7
        %v2508 = vsub.s32 %v2505, %v2507
        %v2509 = vrot.slane %v2499, %v2508
        %v2511 = vunpack.c.l.s4 1966171168
        %v2512 = vunpack.c.0.s8 %v2511
        %v2513 = vlaneseq
        %v2514 = vshrl.u32 %v2513, 7
        %v2515 = vsub.s32 %v2512, %v2514
        %v2516 = vrot.slane %v2500, %v2515
        %v2518 = vunpack.c.l.s4 1966171168
        %v2519 = vunpack.c.0.s8 %v2518
        %v2520 = vlaneseq
        %v2521 = vshrl.u32 %v2520, 7
        %v2522 = vsub.s32 %v2519, %v2521
        %v2523 = vrot.slane %v2501, %v2522
        %v2525 = vunpack.c.l.s4 1966171168
        %v2526 = vunpack.c.0.s8 %v2525
        %v2527 = vlaneseq
        %v2528 = vshrl.u32 %v2527, 7
        %v2529 = vsub.s32 %v2526, %v2528
        %v2530 = vrot.slane %v2502, %v2529
        %v2531 = vcombine.low %v2509, %v2516
        %v2532 = vcombine.low %v2523, %v2530
        %v2534 = vunpack.c.l.s4 1966171168
        %v2535 = vunpack.c.0.s8 %v2534
        %v2536 = vlaneseq
        %v2537 = vshrl.u32 %v2536, 7
        %v2538 = vsub.s32 %v2535, %v2537
        %v2539 = vrot.slane %v2531, %v2538
        %v2541 = vunpack.c.l.s4 1966171168
        %v2542 = vunpack.c.0.s8 %v2541
        %v2543 = vlaneseq
        %v2544 = vshrl.u32 %v2543, 7
        %v2545 = vsub.s32 %v2542, %v2544
        %v2546 = vrot.slane %v2532, %v2545
        %v2547 = vcombine.low %v2539, %v2546
        %v2548 = vcombine.low %v1787, %v1801
        %v2549 = vcombine.low %v1809, %v1811
        %v2550 = vcombine.low %v1794, %v1808
        %v2551 = vcombine.low %v1810, %v1812
        %v2553 = vunpack.c.l.s4 1966171168
        %v2554 = vunpack.c.0.s8 %v2553
        %v2555 = vlaneseq
        %v2556 = vshrl.u32 %v2555, 7
        %v2557 = vsub.s32 %v2554, %v2556
        %v2558 = vrot.slane %v2548, %v2557
        %v2560 = vunpack.c.l.s4 1966171168
        %v2561 = vunpack.c.0.s8 %v2560
        %v2562 = vlaneseq
        %v2563 = vshrl.u32 %v2562, 7
        %v2564 = vsub.s32 %v2561, %v2563
        %v2565 = vrot.slane %v2549, %v2564
        %v2567 = vunpack.c.l.s4 1966171168
        %v2568 = vunpack.c.0.s8 %v2567
        %v2569 = vlaneseq
        %v2570 = vshrl.u32 %v2569, 7
        %v2571 = vsub.s32 %v2568, %v2570
        %v2572 = vrot.slane %v2550, %v2571
        %v2574 = vunpack.c.l.s4 1966171168
        %v2575 = vunpack.c.0.s8 %v2574
        %v2576 = vlaneseq
        %v2577 = vshrl.u32 %v2576, 7
        %v2578 = vsub.s32 %v2575, %v2577
        %v2579 = vrot.slane %v2551, %v2578
        %v2580 = vcombine.low %v2558, %v2565
        %v2581 = vcombine.low %v2572, %v2579
        %v2583 = vunpack.c.l.s4 1966171168
        %v2584 = vunpack.c.0.s8 %v2583
        %v2585 = vlaneseq
        %v2586 = vshrl.u32 %v2585, 7
        %v2587 = vsub.s32 %v2584, %v2586
        %v2588 = vrot.slane %v2580, %v2587
        %v2590 = vunpack.c.l.s4 1966171168
        %v2591 = vunpack.c.0.s8 %v2590
        %v2592 = vlaneseq
        %v2593 = vshrl.u32 %v2592, 7
        %v2594 = vsub.s32 %v2591, %v2593
        %v2595 = vrot.slane %v2581, %v2594
        %v2596 = vcombine.low %v2588, %v2595
        %2597 = vset.pattern.permute.xlu0 0
        %2598 = vperm.xlu0 %2597, %v1861
        %v2599 = vpop.permute.xlu0 %2598
        %2600 = vset.pattern.permute.xlu0 0
        %2601 = vperm.xlu0 %2600, %v1910
        %v2602 = vpop.permute.xlu0 %2601
        %2603 = vset.pattern.permute.xlu0 0
        %2604 = vperm.xlu0 %2603, %v1959
        %v2605 = vpop.permute.xlu0 %2604
        %2606 = vset.pattern.permute.xlu0 0
        %2607 = vperm.xlu0 %2606, %v2008
        %v2608 = vpop.permute.xlu0 %2607
        %2609 = vset.pattern.permute.xlu0 0
        %2610 = vperm.xlu0 %2609, %v2057
        %v2611 = vpop.permute.xlu0 %2610
        %2612 = vset.pattern.permute.xlu0 0
        %2613 = vperm.xlu0 %2612, %v2106
        %v2614 = vpop.permute.xlu0 %2613
        %2615 = vset.pattern.permute.xlu0 0
        %2616 = vperm.xlu0 %2615, %v2155
        %v2617 = vpop.permute.xlu0 %2616
        %2618 = vset.pattern.permute.xlu0 0
        %2619 = vperm.xlu0 %2618, %v2204
        %v2620 = vpop.permute.xlu0 %2619
        %2621 = vset.pattern.permute.xlu0 0
        %2622 = vperm.xlu0 %2621, %v2253
        %v2623 = vpop.permute.xlu0 %2622
        %2624 = vset.pattern.permute.xlu0 0
        %2625 = vperm.xlu0 %2624, %v2302
        %v2626 = vpop.permute.xlu0 %2625
        %2627 = vset.pattern.permute.xlu0 0
        %2628 = vperm.xlu0 %2627, %v2351
        %v2629 = vpop.permute.xlu0 %2628
        %2630 = vset.pattern.permute.xlu0 0
        %2631 = vperm.xlu0 %2630, %v2400
        %v2632 = vpop.permute.xlu0 %2631
        %2633 = vset.pattern.permute.xlu0 0
        %2634 = vperm.xlu0 %2633, %v2449
        %v2635 = vpop.permute.xlu0 %2634
        %2636 = vset.pattern.permute.xlu0 0
        %2637 = vperm.xlu0 %2636, %v2498
        %v2638 = vpop.permute.xlu0 %2637
        %2639 = vset.pattern.permute.xlu0 0
        %2640 = vperm.xlu0 %2639, %v2547
        %v2641 = vpop.permute.xlu0 %2640
        %2642 = vset.pattern.permute.xlu0 0
        %2643 = vperm.xlu0 %2642, %v2596
        %v2644 = vpop.permute.xlu0 %2643
        %v2645 = vlaneseq
        %v2646 = vand.u32 %v2645, 127
        %v2647 = vlaneseq
        %v2648 = vshrl.u32 %v2647, 7
        %v2649 = vsub.s32 %v2646, %v2648
        %v2650 = vrot.slane %v2599, %v2649
        %v2651 = vadd.s32 %v2646, 4294967288
        %v2652 = vlaneseq
        %v2653 = vshrl.u32 %v2652, 7
        %v2654 = vsub.s32 %v2651, %v2653
        %v2655 = vrot.slane %v2602, %v2654
        %vm2656 = vcmask 130112
        %v2657 = vsel %vm2656, %v2655, %v2650
        %v2658 = vadd.s32 %v2646, 4294967280
        %v2659 = vlaneseq
        %v2660 = vshrl.u32 %v2659, 7
        %v2661 = vsub.s32 %v2658, %v2660
        %v2662 = vrot.slane %v2605, %v2661
        %vm2663 = vcmask 195712
        %v2664 = vsel %vm2663, %v2662, %v2657
        %v2665 = vadd.s32 %v2646, 4294967272
        %v2666 = vlaneseq
        %v2667 = vshrl.u32 %v2666, 7
        %v2668 = vsub.s32 %v2665, %v2667
        %v2669 = vrot.slane %v2608, %v2668
        %vm2670 = vcmask 261312
        %v2671 = vsel %vm2670, %v2669, %v2664
        %v2672 = vadd.s32 %v2646, 4294967264
        %v2673 = vlaneseq
        %v2674 = vshrl.u32 %v2673, 7
        %v2675 = vsub.s32 %v2672, %v2674
        %v2676 = vrot.slane %v2611, %v2675
        %vm2677 = vcmask 326912
        %v2678 = vsel %vm2677, %v2676, %v2671
        %v2679 = vadd.s32 %v2646, 4294967256
        %v2680 = vlaneseq
        %v2681 = vshrl.u32 %v2680, 7
        %v2682 = vsub.s32 %v2679, %v2681
        %v2683 = vrot.slane %v2614, %v2682
        %vm2684 = vcmask 392512
        %v2685 = vsel %vm2684, %v2683, %v2678
        %v2686 = vadd.s32 %v2646, 4294967248
        %v2687 = vlaneseq
        %v2688 = vshrl.u32 %v2687, 7
        %v2689 = vsub.s32 %v2686, %v2688
        %v2690 = vrot.slane %v2617, %v2689
        %vm2691 = vcmask 458112
        %v2692 = vsel %vm2691, %v2690, %v2685
        %v2693 = vadd.s32 %v2646, 4294967240
        %v2694 = vlaneseq
        %v2695 = vshrl.u32 %v2694, 7
        %v2696 = vsub.s32 %v2693, %v2695
        %v2697 = vrot.slane %v2620, %v2696
        %vm2698 = vcmask 523712
        %v2699 = vsel %vm2698, %v2697, %v2692
        %v2700 = vadd.s32 %v2646, 4294967232
        %v2701 = vlaneseq
        %v2702 = vshrl.u32 %v2701, 7
        %v2703 = vsub.s32 %v2700, %v2702
        %v2704 = vrot.slane %v2623, %v2703
        %vm2705 = vcmask 589312
        %v2706 = vsel %vm2705, %v2704, %v2699
        %v2707 = vadd.s32 %v2646, 4294967224
        %v2708 = vlaneseq
        %v2709 = vshrl.u32 %v2708, 7
        %v2710 = vsub.s32 %v2707, %v2709
        %v2711 = vrot.slane %v2626, %v2710
        %vm2712 = vcmask 654912
        %v2713 = vsel %vm2712, %v2711, %v2706
        %v2714 = vadd.s32 %v2646, 4294967216
        %v2715 = vlaneseq
        %v2716 = vshrl.u32 %v2715, 7
        %v2717 = vsub.s32 %v2714, %v2716
        %v2718 = vrot.slane %v2629, %v2717
        %vm2719 = vcmask 720512
        %v2720 = vsel %vm2719, %v2718, %v2713
        %v2721 = vadd.s32 %v2646, 4294967208
        %v2722 = vlaneseq
        %v2723 = vshrl.u32 %v2722, 7
        %v2724 = vsub.s32 %v2721, %v2723
        %v2725 = vrot.slane %v2632, %v2724
        %vm2726 = vcmask 786112
        %v2727 = vsel %vm2726, %v2725, %v2720
        %v2728 = vadd.s32 %v2646, 4294967200
        %v2729 = vlaneseq
        %v2730 = vshrl.u32 %v2729, 7
        %v2731 = vsub.s32 %v2728, %v2730
        %v2732 = vrot.slane %v2635, %v2731
        %vm2733 = vcmask 851712
        %v2734 = vsel %vm2733, %v2732, %v2727
        %v2735 = vadd.s32 %v2646, 4294967192
        %v2736 = vlaneseq
        %v2737 = vshrl.u32 %v2736, 7
        %v2738 = vsub.s32 %v2735, %v2737
        %v2739 = vrot.slane %v2638, %v2738
        %vm2740 = vcmask 917312
        %v2741 = vsel %vm2740, %v2739, %v2734
        %v2742 = vadd.s32 %v2646, 4294967184
        %v2743 = vlaneseq
        %v2744 = vshrl.u32 %v2743, 7
        %v2745 = vsub.s32 %v2742, %v2744
        %v2746 = vrot.slane %v2641, %v2745
        %vm2747 = vcmask 982912
        %v2748 = vsel %vm2747, %v2746, %v2741
        %v2749 = vadd.s32 %v2646, 4294967176
        %v2750 = vlaneseq
        %v2751 = vshrl.u32 %v2750, 7
        %v2752 = vsub.s32 %v2749, %v2751
        %v2753 = vrot.slane %v2644, %v2752
        %vm2754 = vcmask 1048512
        %v2755 = vsel %vm2754, %v2753, %v2748
        %v2757 = vunpack.c.l.s4 1966171168
        %v2758 = vunpack.c.0.s8 %v2757
        %v2759 = vlaneseq
        %v2760 = vshrl.u32 %v2759, 7
        %v2761 = vsub.s32 %v2758, %v2760
        %v2762 = vrot.slane %v2755, %v2761
        %v2764 = vunpack.c.l.s4 1966171168
        %v2765 = vunpack.c.0.s8 %v2764
        %v2766 = vlaneseq
        %v2767 = vshrl.u32 %v2766, 7
        %v2768 = vsub.s32 %v2765, %v2767
        %v2769 = vrot.slane %v2762, %v2768
        %v2771 = vmul.f32 %v235, %v2769
        %vm2772 = vcmask 1040384
        %v2773 = vsel %vm2772, %v2771, 0.0
        %2774 = vadd.xlane.f32.xlu0 %v2773
        %v2775 = vpop.xlane.xlu0 %2774
        %v2776 = vrot.slane %v2775, 4
        %v2777 = vadd.f32 %v2775, %v2776
        %v2778 = vrot.slane %v2777, 2
        %v2779 = vadd.f32 %v2777, %v2778
        %v2780 = vrot.slane %v2779, 1
        %v2781 = vadd.f32 %v2779, %v2780
        %s2782 = vtos %v2781
        %s2783 = smul.f32 %s2782, 0.5
        %v2784 = vsel %vm2772, %v235, 0.0
        %2785 = vadd.xlane.f32.xlu0 %v2784
        %v2786 = vpop.xlane.xlu0 %2785
        %v2787 = vrot.slane %v2786, 4
        %v2788 = vadd.f32 %v2786, %v2787
        %v2789 = vrot.slane %v2788, 2
        %v2790 = vadd.f32 %v2788, %v2789
        %v2791 = vrot.slane %v2790, 1
        %v2792 = vadd.f32 %v2790, %v2791
        %s2793 = vtos %v2792
        %v2794 = vlaneseq
        %v2795 = vshrl.u32 %v2794, 7
        %vm2796 = vcmp.eq.s32.totalorder %v2795, 0
        %v2797 = vstv %s2783
        %v2798 = vstv %s2793
        %v2799 = vsel %vm2796, %v2797, %v2798
        %2800 = vst [vmem:[%s189] sm:$0x3] %v2799
        %s2801 = sand.u32 %s103, 1
        %s2802 = scalar_lea.sflag [#allocation3], %s2801
        %s2803 = sand.u32 %s103, 1
        %s2804 = smul.addr %s2803, 2
        %s2805 = scalar_lea.vmem [#allocation2], %s2804
        // Predicated region
        $region33: #{tpu_custom_call.1} parent=31 // pred_check
          %p2806 = pneg %p113
        $region34: #{tpu_custom_call.1} parent=31 // pred_check_branch
          %2808 = sbr.rel (%p2806) target = $region36
        $region35: #{tpu_custom_call.1} parent=31 // pred_region
          %s2810 = ssub.s32 32, 32
          %2811 = vsyncadd %s2802, %s2810
          %s2812 = smul.addr %s17, 32
          %s2813 = scalar_lea.hbm %s3, %s2812
          %s2815 = sshll.u32 %s2805, 4
          %s2816 = int_to_ptr.vmem [resolvable:$true] %s2815
          %2818 = dma.vmem_to_hbm [thread:$0]  %s2816, 32, %s2813, %s2802
        $region36: #{tpu_custom_call.1} parent=31 // pred_fallthru
          _
      $region32: #{tpu_custom_call.1} parent=5 // pred_fallthru
        _
      %p2819 = scmp.le.s32.totalorder 2, %s12
      // Predicated region
      $region37: #{tpu_custom_call.1} parent=5 // pred_check
        %p2820 = pneg %p2819
      $region38: #{tpu_custom_call.1} parent=5 // pred_check_branch
        %2822 = sbr.rel (%p2820) target = $region40
      $region39: #{tpu_custom_call.1} parent=5 // pred_region
        %s2823 = ssub.s32 %s12, 2
        // Predicated region
        $region41: #{tpu_custom_call.1} parent=39 // pred_check
          %p2824 = pneg %p119
        $region42: #{tpu_custom_call.1} parent=39 // pred_check_branch
          %2826 = sbr.rel (%p2824) target = $region44
        $region43: #{tpu_custom_call.1} parent=39 // pred_region
          %s2827 = sand.u32 %s104, 1
          %s2828 = scalar_lea.sflag [#allocation3], %s2827
          %s2829 = sand.u32 %s104, 1
          %s2830 = smul.addr %s2829, 2
          %s2831 = scalar_lea.vmem [#allocation2], %s2830
          %2832 = dma.done %s2828, 32
        $region44: #{tpu_custom_call.1} parent=39 // pred_fallthru
          _
      $region40: #{tpu_custom_call.1} parent=5 // pred_fallthru
        _
    $region6: #{tpu_custom_call.1} parent=1 // loop_footer
      %s16 = sadd.s32 1, %s12
    $region7: #{tpu_custom_call.1} parent=1 // loop_footer_branch
      %11 = sbr.rel target = $region3
    $region8: #{tpu_custom_call.1} parent=1 // loop_exit
      _
    %2833 = vsyncpa [#allocation3], 1
    %s2834 = scalar_lea.sflag [#allocation3], 1
    %2835 = vsyncpa %s2834, 1

</llo_original>
